<compile_context>
chip_gen: v6e
topology: v6e:2x2x1
jax: 0.10.0
libtpu: 0.0.40
codegen_flags: <defaults>
</compile_context>

<pallas_src>
import functools

import jax
import jax.numpy as jnp
from jax import lax
from jax.experimental import pallas as pl
from jax.experimental.pallas import tpu as pltpu


DEFAULT_T_CHUNK = 32  # time steps per grid iteration (pipelined chunk)


def _round_up(x, m):
    return (x + m - 1) // m * m


def _tanh_sigmoid(x):
    # sigmoid(x) == 0.5 * tanh(0.5 * x) + 0.5 ; one EUP push instead of two.
    return 0.5 * jnp.tanh(0.5 * x) + 0.5


def deepar_lstm_kernel(x_ref, wih_ref, whh_ref, b_ref, wfc_ref, bfc_ref,
                       out_ref, gates_scr, h_scr, c_scr,
                       *, t_chunk, t_total, b_pad, h_pad):
    """One T-chunk of the LSTM recurrence (grid axis 0 = chunk index).

    x_ref:     (TC*Bp, Ip)   lane-dense time-major inputs for this chunk
    wih_ref:   (Ip, 4*Hp)    input->gate weights (rows & per-gate cols padded)
    whh_ref:   (Hp, 4*Hp)    hidden->gate weights
    b_ref:     (1, 4*Hp)     combined bias b_ih + b_hh (padded lanes are 0)
    wfc_ref:   (Hp, 128)     FC head weight, zero-padded to 128 lanes
    bfc_ref:   (1, 128)      FC head bias (column 0 valid)
    out_ref:   (Bp, 128)     prediction, lane-dense (column 0 valid)
    gates_scr: (TC*Bp, 4*Hp) VMEM scratch: x @ W_ih + b for this chunk
    h_scr/c_scr: (Bp, Hp)    persistent hidden/cell state across chunks
    """
    chunk = pl.program_id(0)

    @pl.when(chunk == 0)
    def _():
        h_scr[...] = jnp.zeros_like(h_scr)
        c_scr[...] = jnp.zeros_like(c_scr)

    # Batched input projection for the whole chunk: one well-shaped MXU matmul
    # plus a single bias broadcast (instead of TC tiny matmuls in the loop).
    gates_scr[...] = (
        jnp.dot(x_ref[...], wih_ref[...], preferred_element_type=jnp.float32)
        + b_ref[...])

    # Only the last chunk can contain padded time steps.
    needs_mask = (t_total % t_chunk) != 0

    def step(t, carry):
        h, c = carry
        row0 = pl.multiple_of(t * b_pad, b_pad)  # b_pad is a multiple of 8
        # W_hh is read from VMEM inside the loop (not hoisted as a value) so
        # the unrolled body does not pin a huge live range / force spills.
        g = gates_scr[pl.ds(row0, b_pad), :] + jnp.dot(
            h, whh_ref[...], preferred_element_type=jnp.float32)
        # Gate order [i, f, g, o] (PyTorch nn.LSTM). Each slice is a whole
        # 128-lane tile because H is padded to Hp -> free views, no shuffles.
        i_g = _tanh_sigmoid(g[:, 0 * h_pad:1 * h_pad])
        f_g = _tanh_sigmoid(g[:, 1 * h_pad:2 * h_pad])
        g_g = jnp.tanh(g[:, 2 * h_pad:3 * h_pad])
        o_g = _tanh_sigmoid(g[:, 3 * h_pad:4 * h_pad])
        c_new = f_g * c + i_g * g_g
        h_new = o_g * jnp.tanh(c_new)
        if needs_mask:
            valid = (chunk * t_chunk + t) < t_total
            h_new = jnp.where(valid, h_new, h)
            c_new = jnp.where(valid, c_new, c)
        return h_new, c_new

    h_last, c_last = lax.fori_loop(0, t_chunk, step, (h_scr[...], c_scr[...]),
                                   unroll=min(t_chunk, 8))
    h_scr[...] = h_last
    c_scr[...] = c_last

    @pl.when(chunk == pl.num_programs(0) - 1)
    def _():
        # Fused FC head: (Bp, Hp) @ (Hp, 128) + bias -> lane-dense output.
        out_ref[...] = (
            jnp.dot(h_last, wfc_ref[...], preferred_element_type=jnp.float32)
            + bfc_ref[...])


def _vmem_limit_bytes(t_chunk, b_pad, i_pad, h_pad):
    f32 = 4
    est = (
        2 * t_chunk * b_pad * i_pad * f32                 # x chunk (double buf)
        + 2 * (i_pad + h_pad + 1) * 4 * h_pad * f32       # W_ih, W_hh, b
        + 2 * (h_pad + 1) * 128 * f32                     # w_fc, b_fc
        + t_chunk * b_pad * 4 * h_pad * f32               # gates scratch
        + 2 * b_pad * h_pad * f32                         # h, c scratch
        + 2 * b_pad * 128 * f32)                          # output
    return min(max(2 * est, 32 * 1024 * 1024), 64 * 1024 * 1024)


def _deepar_forward_impl(product_seq, quantity_seq, params):
    """product_seq: (B, T) int32, quantity_seq: (B, T) f32 -> (B, 1) f32."""
    # TODO(synk): the nn.Embedding gather / concat stay as JAX ops (fused into
    # this single jit) rather than an in-kernel gather.
    emb = params["embedding"][product_seq]                           # (B, T, E)
    x = jnp.concatenate(
        [emb, quantity_seq[..., None].astype(emb.dtype)], axis=-1)   # (B, T, I)
    x_tbi = jnp.transpose(x, (1, 0, 2)).astype(jnp.float32)          # (T, B, I)
    T, B, I = x_tbi.shape
    H = params["w_hh"].shape[0]

    # (8,128)-aligned padding. Padded weight rows/cols and bias lanes are zero,
    # so padded hidden lanes stay exactly 0 through the recurrence.
    Bp = _round_up(max(B, 8), 8)
    Hp = _round_up(max(H, 128), 128)
    Ip = _round_up(max(I, 128), 128)

    TC = min(DEFAULT_T_CHUNK, T)
    num_chunks = pl.cdiv(T, TC)
    Tp = num_chunks * TC

    # Lane-dense 2-D input slab (Tp*Bp, Ip); row index = t*Bp + b.
    x_p = jnp.pad(x_tbi, ((0, Tp - T), (0, Bp - B), (0, Ip - I)))
    x_p = x_p.reshape(Tp * Bp, Ip)

    def pad_gate_cols(w):
        # (rows, 4H) -> (rows, 4Hp): gate k's H cols land at [k*Hp, k*Hp+H).
        rows = w.shape[0]
        return jnp.pad(w.reshape(rows, 4, H),
                       ((0, 0), (0, 0), (0, Hp - H))).reshape(rows, 4 * Hp)

    wih_p = jnp.pad(pad_gate_cols(params["w_ih"]),
                    ((0, Ip - I), (0, 0)))                           # (Ip, 4Hp)
    whh_p = jnp.pad(pad_gate_cols(params["w_hh"]),
                    ((0, Hp - H), (0, 0)))                           # (Hp, 4Hp)
    b_p = pad_gate_cols(params["b"])                                 # (1, 4Hp)
    wfc_p = jnp.pad(params["w_fc"], ((0, Hp - H), (0, 127)))         # (Hp, 128)
    bfc_p = jnp.pad(params["b_fc"], ((0, 0), (0, 127)))              # (1, 128)

    kernel = functools.partial(deepar_lstm_kernel,
                               t_chunk=TC, t_total=T, b_pad=Bp, h_pad=Hp)

    out_p = pl.pallas_call(
        kernel,
        out_shape=jax.ShapeDtypeStruct((Bp, 128), jnp.float32),
        grid_spec=pltpu.PrefetchScalarGridSpec(
            num_scalar_prefetch=0,
            grid=(num_chunks,),                                      # T-chunks
            in_specs=[
                pl.BlockSpec((TC * Bp, Ip), lambda c: (c, 0)),       # x chunk
                pl.BlockSpec((Ip, 4 * Hp), lambda c: (0, 0)),        # W_ih
                pl.BlockSpec((Hp, 4 * Hp), lambda c: (0, 0)),        # W_hh
                pl.BlockSpec((1, 4 * Hp), lambda c: (0, 0)),         # b
                pl.BlockSpec((Hp, 128), lambda c: (0, 0)),           # w_fc
                pl.BlockSpec((1, 128), lambda c: (0, 0)),            # b_fc
            ],
            out_specs=pl.BlockSpec((Bp, 128), lambda c: (0, 0)),     # lane-dense
            scratch_shapes=[
                pltpu.VMEM((TC * Bp, 4 * Hp), jnp.float32),          # gates
                pltpu.VMEM((Bp, Hp), jnp.float32),                   # h carry
                pltpu.VMEM((Bp, Hp), jnp.float32),                   # c carry
            ],
        ),
        compiler_params=pltpu.CompilerParams(
            dimension_semantics=("arbitrary",),
            vmem_limit_bytes=_vmem_limit_bytes(TC, Bp, Ip, Hp)),
    )(x_p, wih_p, whh_p, b_p, wfc_p, bfc_p)

    return out_p[:B, :1]


# Single dispatch end-to-end: gather/concat/pads fuse with the pallas_call.
deepar_forward = jax.jit(_deepar_forward_impl)


def deepar_reference(product_seq, quantity_seq, params):
    """Pure-JAX reference of the same forward pass (for validation)."""
    emb = params["embedding"][product_seq]
    x = jnp.concatenate([emb, quantity_seq[..., None]], axis=-1)
    B = x.shape[0]
    H = params["w_hh"].shape[0]

    def step(carry, x_t):
        h, c = carry
        gates = x_t @ params["w_ih"] + h @ params["w_hh"] + params["b"][0]
        i_g = jax.nn.sigmoid(gates[:, 0:H])
        f_g = jax.nn.sigmoid(gates[:, H:2 * H])
        g_g = jnp.tanh(gates[:, 2 * H:3 * H])
        o_g = jax.nn.sigmoid(gates[:, 3 * H:4 * H])
        c_new = f_g * c + i_g * g_g
        h_new = o_g * jnp.tanh(c_new)
        return (h_new, c_new), None

    h0 = jnp.zeros((B, H), jnp.float32)
    c0 = jnp.zeros((B, H), jnp.float32)
    (h_last, _), _ = jax.lax.scan(step, (h0, c0),
                                  jnp.transpose(x, (1, 0, 2)).astype(jnp.float32))
    return h_last @ params["w_fc"] + params["b_fc"]


def init_params(key, num_products, embedding_dim, hidden_size):
    input_size = embedding_dim + 1
    H = hidden_size
    k = jax.random.split(key, 7)
    s = 1.0 / jnp.sqrt(H)
    params = {
        "embedding": jax.random.normal(k[0], (num_products, embedding_dim),
                                       jnp.float32),
        # stored transposed vs. PyTorch (4H, I) -> (I, 4H); gate order [i,f,g,o]
        "w_ih": jax.random.uniform(k[1], (input_size, 4 * H), jnp.float32, -s, s),
        "w_hh": jax.random.uniform(k[2], (H, 4 * H), jnp.float32, -s, s),
        # combined bias b_ih + b_hh
        "b": (jax.random.uniform(k[3], (1, 4 * H), jnp.float32, -s, s)
              + jax.random.uniform(k[4], (1, 4 * H), jnp.float32, -s, s)),
        "w_fc": jax.random.uniform(k[5], (H, 1), jnp.float32, -s, s),
        "b_fc": jax.random.uniform(k[6], (1, 1), jnp.float32, -s, s),
    }
    return params


if __name__ == "__main__":
    num_products = 10
    embedding_dim = 7      # input_size = embedding_dim + 1 = 8
    hidden_size = 32
    batch = 4
    window = 8

    key = jax.random.PRNGKey(0)
    kp, kq, kw = jax.random.split(key, 3)

    product_seq = jax.random.randint(kp, (batch, window), 0, num_products,
                                     dtype=jnp.int32)
    quantity_seq = jax.random.normal(kq, (batch, window), jnp.float32)
    params = init_params(kw, num_products, embedding_dim, hidden_size)

    pred = deepar_forward(product_seq, quantity_seq, params)
    pred = jax.block_until_ready(pred)

    ref = deepar_reference(product_seq, quantity_seq, params)
    assert pred.shape == (batch, 1)
    assert jnp.allclose(pred, ref, atol=1e-4, rtol=1e-4), (pred, ref)

    print("KERNEL_OK")
</pallas_src>

<mosaic_0001>
module attributes {stable_mosaic.version = 11 : i64} {
  func.func @deepar_lstm_kernel(%arg0: i32, %arg1: memref<64x128xf32, #tpu.memory_space<vmem>>, %arg2: memref<128x512xf32, #tpu.memory_space<vmem>>, %arg3: memref<128x512xf32, #tpu.memory_space<vmem>>, %arg4: memref<1x512xf32, #tpu.memory_space<vmem>>, %arg5: memref<128x128xf32, #tpu.memory_space<vmem>>, %arg6: memref<1x128xf32, #tpu.memory_space<vmem>>, %arg7: memref<8x128xf32, #tpu.memory_space<vmem>>, %arg8: memref<64x512xf32, #tpu.memory_space<vmem>>, %arg9: memref<8x128xf32, #tpu.memory_space<vmem>>, %arg10: memref<8x128xf32, #tpu.memory_space<vmem>>) attributes {dimension_semantics = [#tpu.dimension_semantics<arbitrary>], iteration_bounds = array<i64: 1>, scalar_prefetch = 0 : i64, scratch_operands = 3 : i64, tpu.core_type = #tpu.core_type<tc>, window_params = [{transform_indices = @transform_0, window_bounds = array<i64: 64, 128>}, {pipeline_mode = #tpu.pipeline_mode<synchronous>, transform_indices = @transform_1, window_bounds = array<i64: 128, 512>}, {pipeline_mode = #tpu.pipeline_mode<synchronous>, transform_indices = @transform_2, window_bounds = array<i64: 128, 512>}, {pipeline_mode = #tpu.pipeline_mode<synchronous>, transform_indices = @transform_3, window_bounds = array<i64: 1, 512>}, {pipeline_mode = #tpu.pipeline_mode<synchronous>, transform_indices = @transform_4, window_bounds = array<i64: 128, 128>}, {pipeline_mode = #tpu.pipeline_mode<synchronous>, transform_indices = @transform_5, window_bounds = array<i64: 1, 128>}, {pipeline_mode = #tpu.pipeline_mode<synchronous>, transform_indices = @transform_6, window_bounds = array<i64: 8, 128>}]} {
    %c0_i32 = arith.constant 0 : i32
    %0 = arith.cmpi eq, %arg0, %c0_i32 : i32
    %1 = arith.extui %0 : i1 to i32
    %c0_i32_0 = arith.constant 0 : i32
    %2 = arith.cmpi ne, %1, %c0_i32_0 : i32
    scf.if %2 {
      %cst_131 = arith.constant 0.000000e+00 : f32
      %321 = vector.broadcast %cst_131 : f32 to vector<8x128xf32>
      %c0_132 = arith.constant 0 : index
      %c0_133 = arith.constant 0 : index
      %322 = vector.load %arg9[%c0_132, %c0_133] : memref<8x128xf32, #tpu.memory_space<vmem>>, vector<8x128xf32>
      tpu.vector_store %arg9[%c0_132, %c0_133], %321 {strides = array<i32>} : memref<8x128xf32, #tpu.memory_space<vmem>>, vector<8x128xf32>,
      %cst_134 = arith.constant 0.000000e+00 : f32
      %323 = vector.broadcast %cst_134 : f32 to vector<8x128xf32>
      %c0_135 = arith.constant 0 : index
      %c0_136 = arith.constant 0 : index
      %324 = vector.load %arg10[%c0_135, %c0_136] : memref<8x128xf32, #tpu.memory_space<vmem>>, vector<8x128xf32>
      tpu.vector_store %arg10[%c0_135, %c0_136], %323 {strides = array<i32>} : memref<8x128xf32, #tpu.memory_space<vmem>>, vector<8x128xf32>,
    } else {
    }
    %c0 = arith.constant 0 : index
    %c0_1 = arith.constant 0 : index
    %3 = vector.load %arg1[%c0, %c0_1] : memref<64x128xf32, #tpu.memory_space<vmem>>, vector<64x128xf32>
    %c0_2 = arith.constant 0 : index
    %c0_3 = arith.constant 0 : index
    %4 = vector.load %arg2[%c0_2, %c0_3] : memref<128x512xf32, #tpu.memory_space<vmem>>, vector<128x512xf32>
    %cst = arith.constant dense<0.000000e+00> : vector<64x512xf32>
    %5 = tpu.matmul %3, %4, %cst {dimension_numbers = #tpu.dot_dimension_numbers<[1], [0], [0], [1], [0, 0, 1, 1], [], []>} : vector<64x128xf32>, vector<128x512xf32>, vector<64x512xf32> -> vector<64x512xf32>
    %c0_4 = arith.constant 0 : index
    %c0_5 = arith.constant 0 : index
    %6 = vector.load %arg4[%c0_4, %c0_5] : memref<1x512xf32, #tpu.memory_space<vmem>>, vector<1x512xf32>
    %7 = vector.broadcast %6 : vector<1x512xf32> to vector<64x512xf32>
    %8 = arith.addf %5, %7 : vector<64x512xf32>
    %c0_6 = arith.constant 0 : index
    %c0_7 = arith.constant 0 : index
    %9 = vector.load %arg8[%c0_6, %c0_7] : memref<64x512xf32, #tpu.memory_space<vmem>>, vector<64x512xf32>
    tpu.vector_store %arg8[%c0_6, %c0_7], %8 {strides = array<i32>} : memref<64x512xf32, #tpu.memory_space<vmem>>, vector<64x512xf32>,
    %c0_8 = arith.constant 0 : index
    %c0_9 = arith.constant 0 : index
    %10 = vector.load %arg9[%c0_8, %c0_9] : memref<8x128xf32, #tpu.memory_space<vmem>>, vector<8x128xf32>
    %c0_10 = arith.constant 0 : index
    %c0_11 = arith.constant 0 : index
    %11 = vector.load %arg10[%c0_10, %c0_11] : memref<8x128xf32, #tpu.memory_space<vmem>>, vector<8x128xf32>
    %c0_i32_12 = arith.constant 0 : i32
    %c8_i32 = arith.constant 8 : i32
    %12 = arith.muli %c0_i32_12, %c8_i32 : i32
    %13 = tpu.assume_multiple %12, 8 : i32
    %14 = arith.index_cast %13 : i32 to index
    %c0_13 = arith.constant 0 : index
    %15 = vector.load %arg8[%14, %c0_13] : memref<64x512xf32, #tpu.memory_space<vmem>>, vector<8x512xf32>
    %c0_14 = arith.constant 0 : index
    %c0_15 = arith.constant 0 : index
    %16 = vector.load %arg3[%c0_14, %c0_15] : memref<128x512xf32, #tpu.memory_space<vmem>>, vector<128x512xf32>
    %cst_16 = arith.constant dense<0.000000e+00> : vector<8x512xf32>
    %17 = tpu.matmul %10, %16, %cst_16 {dimension_numbers = #tpu.dot_dimension_numbers<[1], [0], [0], [1], [0, 0, 1, 1], [], []>} : vector<8x128xf32>, vector<128x512xf32>, vector<8x512xf32> -> vector<8x512xf32>
    %18 = arith.addf %15, %17 : vector<8x512xf32>
    %19 = vector.extract_strided_slice %18 {offsets = [0, 0], sizes = [8, 128], strides = [1, 1]} : vector<8x512xf32> to vector<8x128xf32>
    %cst_17 = arith.constant 5.000000e-01 : f32
    %20 = vector.broadcast %cst_17 : f32 to vector<8x128xf32>
    %21 = arith.mulf %20, %19 : vector<8x128xf32>
    %22 = math.tanh %21 : vector<8x128xf32>
    %cst_18 = arith.constant 5.000000e-01 : f32
    %23 = vector.broadcast %cst_18 : f32 to vector<8x128xf32>
    %24 = arith.mulf %23, %22 : vector<8x128xf32>
    %cst_19 = arith.constant 5.000000e-01 : f32
    %25 = vector.broadcast %cst_19 : f32 to vector<8x128xf32>
    %26 = arith.addf %24, %25 : vector<8x128xf32>
    %27 = vector.extract_strided_slice %18 {offsets = [0, 128], sizes = [8, 128], strides = [1, 1]} : vector<8x512xf32> to vector<8x128xf32>
    %cst_20 = arith.constant 5.000000e-01 : f32
    %28 = vector.broadcast %cst_20 : f32 to vector<8x128xf32>
    %29 = arith.mulf %28, %27 : vector<8x128xf32>
    %30 = math.tanh %29 : vector<8x128xf32>
    %cst_21 = arith.constant 5.000000e-01 : f32
    %31 = vector.broadcast %cst_21 : f32 to vector<8x128xf32>
    %32 = arith.mulf %31, %30 : vector<8x128xf32>
    %cst_22 = arith.constant 5.000000e-01 : f32
    %33 = vector.broadcast %cst_22 : f32 to vector<8x128xf32>
    %34 = arith.addf %32, %33 : vector<8x128xf32>
    %35 = vector.extract_strided_slice %18 {offsets = [0, 256], sizes = [8, 128], strides = [1, 1]} : vector<8x512xf32> to vector<8x128xf32>
    %36 = math.tanh %35 : vector<8x128xf32>
    %37 = vector.extract_strided_slice %18 {offsets = [0, 384], sizes = [8, 128], strides = [1, 1]} : vector<8x512xf32> to vector<8x128xf32>
    %cst_23 = arith.constant 5.000000e-01 : f32
    %38 = vector.broadcast %cst_23 : f32 to vector<8x128xf32>
    %39 = arith.mulf %38, %37 : vector<8x128xf32>
    %40 = math.tanh %39 : vector<8x128xf32>
    %cst_24 = arith.constant 5.000000e-01 : f32
    %41 = vector.broadcast %cst_24 : f32 to vector<8x128xf32>
    %42 = arith.mulf %41, %40 : vector<8x128xf32>
    %cst_25 = arith.constant 5.000000e-01 : f32
    %43 = vector.broadcast %cst_25 : f32 to vector<8x128xf32>
    %44 = arith.addf %42, %43 : vector<8x128xf32>
    %45 = arith.mulf %34, %11 : vector<8x128xf32>
    %46 = arith.mulf %26, %36 : vector<8x128xf32>
    %47 = arith.addf %45, %46 : vector<8x128xf32>
    %48 = math.tanh %47 : vector<8x128xf32>
    %49 = arith.mulf %44, %48 : vector<8x128xf32>
    %c1_i32 = arith.constant 1 : i32
    %c8_i32_26 = arith.constant 8 : i32
    %50 = arith.muli %c1_i32, %c8_i32_26 : i32
    %51 = tpu.assume_multiple %50, 8 : i32
    %52 = arith.index_cast %51 : i32 to index
    %c0_27 = arith.constant 0 : index
    %53 = vector.load %arg8[%52, %c0_27] : memref<64x512xf32, #tpu.memory_space<vmem>>, vector<8x512xf32>
    %c0_28 = arith.constant 0 : index
    %c0_29 = arith.constant 0 : index
    %54 = vector.load %arg3[%c0_28, %c0_29] : memref<128x512xf32, #tpu.memory_space<vmem>>, vector<128x512xf32>
    %cst_30 = arith.constant dense<0.000000e+00> : vector<8x512xf32>
    %55 = tpu.matmul %49, %54, %cst_30 {dimension_numbers = #tpu.dot_dimension_numbers<[1], [0], [0], [1], [0, 0, 1, 1], [], []>} : vector<8x128xf32>, vector<128x512xf32>, vector<8x512xf32> -> vector<8x512xf32>
    %56 = arith.addf %53, %55 : vector<8x512xf32>
    %57 = vector.extract_strided_slice %56 {offsets = [0, 0], sizes = [8, 128], strides = [1, 1]} : vector<8x512xf32> to vector<8x128xf32>
    %cst_31 = arith.constant 5.000000e-01 : f32
    %58 = vector.broadcast %cst_31 : f32 to vector<8x128xf32>
    %59 = arith.mulf %58, %57 : vector<8x128xf32>
    %60 = math.tanh %59 : vector<8x128xf32>
    %cst_32 = arith.constant 5.000000e-01 : f32
    %61 = vector.broadcast %cst_32 : f32 to vector<8x128xf32>
    %62 = arith.mulf %61, %60 : vector<8x128xf32>
    %cst_33 = arith.constant 5.000000e-01 : f32
    %63 = vector.broadcast %cst_33 : f32 to vector<8x128xf32>
    %64 = arith.addf %62, %63 : vector<8x128xf32>
    %65 = vector.extract_strided_slice %56 {offsets = [0, 128], sizes = [8, 128], strides = [1, 1]} : vector<8x512xf32> to vector<8x128xf32>
    %cst_34 = arith.constant 5.000000e-01 : f32
    %66 = vector.broadcast %cst_34 : f32 to vector<8x128xf32>
    %67 = arith.mulf %66, %65 : vector<8x128xf32>
    %68 = math.tanh %67 : vector<8x128xf32>
    %cst_35 = arith.constant 5.000000e-01 : f32
    %69 = vector.broadcast %cst_35 : f32 to vector<8x128xf32>
    %70 = arith.mulf %69, %68 : vector<8x128xf32>
    %cst_36 = arith.constant 5.000000e-01 : f32
    %71 = vector.broadcast %cst_36 : f32 to vector<8x128xf32>
    %72 = arith.addf %70, %71 : vector<8x128xf32>
    %73 = vector.extract_strided_slice %56 {offsets = [0, 256], sizes = [8, 128], strides = [1, 1]} : vector<8x512xf32> to vector<8x128xf32>
    %74 = math.tanh %73 : vector<8x128xf32>
    %75 = vector.extract_strided_slice %56 {offsets = [0, 384], sizes = [8, 128], strides = [1, 1]} : vector<8x512xf32> to vector<8x128xf32>
    %cst_37 = arith.constant 5.000000e-01 : f32
    %76 = vector.broadcast %cst_37 : f32 to vector<8x128xf32>
    %77 = arith.mulf %76, %75 : vector<8x128xf32>
    %78 = math.tanh %77 : vector<8x128xf32>
    %cst_38 = arith.constant 5.000000e-01 : f32
    %79 = vector.broadcast %cst_38 : f32 to vector<8x128xf32>
    %80 = arith.mulf %79, %78 : vector<8x128xf32>
    %cst_39 = arith.constant 5.000000e-01 : f32
    %81 = vector.broadcast %cst_39 : f32 to vector<8x128xf32>
    %82 = arith.addf %80, %81 : vector<8x128xf32>
    %83 = arith.mulf %72, %47 : vector<8x128xf32>
    %84 = arith.mulf %64, %74 : vector<8x128xf32>
    %85 = arith.addf %83, %84 : vector<8x128xf32>
    %86 = math.tanh %85 : vector<8x128xf32>
    %87 = arith.mulf %82, %86 : vector<8x128xf32>
    %c2_i32 = arith.constant 2 : i32
    %c8_i32_40 = arith.constant 8 : i32
    %88 = arith.muli %c2_i32, %c8_i32_40 : i32
    %89 = tpu.assume_multiple %88, 8 : i32
    %90 = arith.index_cast %89 : i32 to index
    %c0_41 = arith.constant 0 : index
    %91 = vector.load %arg8[%90, %c0_41] : memref<64x512xf32, #tpu.memory_space<vmem>>, vector<8x512xf32>
    %c0_42 = arith.constant 0 : index
    %c0_43 = arith.constant 0 : index
    %92 = vector.load %arg3[%c0_42, %c0_43] : memref<128x512xf32, #tpu.memory_space<vmem>>, vector<128x512xf32>
    %cst_44 = arith.constant dense<0.000000e+00> : vector<8x512xf32>
    %93 = tpu.matmul %87, %92, %cst_44 {dimension_numbers = #tpu.dot_dimension_numbers<[1], [0], [0], [1], [0, 0, 1, 1], [], []>} : vector<8x128xf32>, vector<128x512xf32>, vector<8x512xf32> -> vector<8x512xf32>
    %94 = arith.addf %91, %93 : vector<8x512xf32>
    %95 = vector.extract_strided_slice %94 {offsets = [0, 0], sizes = [8, 128], strides = [1, 1]} : vector<8x512xf32> to vector<8x128xf32>
    %cst_45 = arith.constant 5.000000e-01 : f32
    %96 = vector.broadcast %cst_45 : f32 to vector<8x128xf32>
    %97 = arith.mulf %96, %95 : vector<8x128xf32>
    %98 = math.tanh %97 : vector<8x128xf32>
    %cst_46 = arith.constant 5.000000e-01 : f32
    %99 = vector.broadcast %cst_46 : f32 to vector<8x128xf32>
    %100 = arith.mulf %99, %98 : vector<8x128xf32>
    %cst_47 = arith.constant 5.000000e-01 : f32
    %101 = vector.broadcast %cst_47 : f32 to vector<8x128xf32>
    %102 = arith.addf %100, %101 : vector<8x128xf32>
    %103 = vector.extract_strided_slice %94 {offsets = [0, 128], sizes = [8, 128], strides = [1, 1]} : vector<8x512xf32> to vector<8x128xf32>
    %cst_48 = arith.constant 5.000000e-01 : f32
    %104 = vector.broadcast %cst_48 : f32 to vector<8x128xf32>
    %105 = arith.mulf %104, %103 : vector<8x128xf32>
    %106 = math.tanh %105 : vector<8x128xf32>
    %cst_49 = arith.constant 5.000000e-01 : f32
    %107 = vector.broadcast %cst_49 : f32 to vector<8x128xf32>
    %108 = arith.mulf %107, %106 : vector<8x128xf32>
    %cst_50 = arith.constant 5.000000e-01 : f32
    %109 = vector.broadcast %cst_50 : f32 to vector<8x128xf32>
    %110 = arith.addf %108, %109 : vector<8x128xf32>
    %111 = vector.extract_strided_slice %94 {offsets = [0, 256], sizes = [8, 128], strides = [1, 1]} : vector<8x512xf32> to vector<8x128xf32>
    %112 = math.tanh %111 : vector<8x128xf32>
    %113 = vector.extract_strided_slice %94 {offsets = [0, 384], sizes = [8, 128], strides = [1, 1]} : vector<8x512xf32> to vector<8x128xf32>
    %cst_51 = arith.constant 5.000000e-01 : f32
    %114 = vector.broadcast %cst_51 : f32 to vector<8x128xf32>
    %115 = arith.mulf %114, %113 : vector<8x128xf32>
    %116 = math.tanh %115 : vector<8x128xf32>
    %cst_52 = arith.constant 5.000000e-01 : f32
    %117 = vector.broadcast %cst_52 : f32 to vector<8x128xf32>
    %118 = arith.mulf %117, %116 : vector<8x128xf32>
    %cst_53 = arith.constant 5.000000e-01 : f32
    %119 = vector.broadcast %cst_53 : f32 to vector<8x128xf32>
    %120 = arith.addf %118, %119 : vector<8x128xf32>
    %121 = arith.mulf %110, %85 : vector<8x128xf32>
    %122 = arith.mulf %102, %112 : vector<8x128xf32>
    %123 = arith.addf %121, %122 : vector<8x128xf32>
    %124 = math.tanh %123 : vector<8x128xf32>
    %125 = arith.mulf %120, %124 : vector<8x128xf32>
    %c3_i32 = arith.constant 3 : i32
    %c8_i32_54 = arith.constant 8 : i32
    %126 = arith.muli %c3_i32, %c8_i32_54 : i32
    %127 = tpu.assume_multiple %126, 8 : i32
    %128 = arith.index_cast %127 : i32 to index
    %c0_55 = arith.constant 0 : index
    %129 = vector.load %arg8[%128, %c0_55] : memref<64x512xf32, #tpu.memory_space<vmem>>, vector<8x512xf32>
    %c0_56 = arith.constant 0 : index
    %c0_57 = arith.constant 0 : index
    %130 = vector.load %arg3[%c0_56, %c0_57] : memref<128x512xf32, #tpu.memory_space<vmem>>, vector<128x512xf32>
    %cst_58 = arith.constant dense<0.000000e+00> : vector<8x512xf32>
    %131 = tpu.matmul %125, %130, %cst_58 {dimension_numbers = #tpu.dot_dimension_numbers<[1], [0], [0], [1], [0, 0, 1, 1], [], []>} : vector<8x128xf32>, vector<128x512xf32>, vector<8x512xf32> -> vector<8x512xf32>
    %132 = arith.addf %129, %131 : vector<8x512xf32>
    %133 = vector.extract_strided_slice %132 {offsets = [0, 0], sizes = [8, 128], strides = [1, 1]} : vector<8x512xf32> to vector<8x128xf32>
    %cst_59 = arith.constant 5.000000e-01 : f32
    %134 = vector.broadcast %cst_59 : f32 to vector<8x128xf32>
    %135 = arith.mulf %134, %133 : vector<8x128xf32>
    %136 = math.tanh %135 : vector<8x128xf32>
    %cst_60 = arith.constant 5.000000e-01 : f32
    %137 = vector.broadcast %cst_60 : f32 to vector<8x128xf32>
    %138 = arith.mulf %137, %136 : vector<8x128xf32>
    %cst_61 = arith.constant 5.000000e-01 : f32
    %139 = vector.broadcast %cst_61 : f32 to vector<8x128xf32>
    %140 = arith.addf %138, %139 : vector<8x128xf32>
    %141 = vector.extract_strided_slice %132 {offsets = [0, 128], sizes = [8, 128], strides = [1, 1]} : vector<8x512xf32> to vector<8x128xf32>
    %cst_62 = arith.constant 5.000000e-01 : f32
    %142 = vector.broadcast %cst_62 : f32 to vector<8x128xf32>
    %143 = arith.mulf %142, %141 : vector<8x128xf32>
    %144 = math.tanh %143 : vector<8x128xf32>
    %cst_63 = arith.constant 5.000000e-01 : f32
    %145 = vector.broadcast %cst_63 : f32 to vector<8x128xf32>
    %146 = arith.mulf %145, %144 : vector<8x128xf32>
    %cst_64 = arith.constant 5.000000e-01 : f32
    %147 = vector.broadcast %cst_64 : f32 to vector<8x128xf32>
    %148 = arith.addf %146, %147 : vector<8x128xf32>
    %149 = vector.extract_strided_slice %132 {offsets = [0, 256], sizes = [8, 128], strides = [1, 1]} : vector<8x512xf32> to vector<8x128xf32>
    %150 = math.tanh %149 : vector<8x128xf32>
    %151 = vector.extract_strided_slice %132 {offsets = [0, 384], sizes = [8, 128], strides = [1, 1]} : vector<8x512xf32> to vector<8x128xf32>
    %cst_65 = arith.constant 5.000000e-01 : f32
    %152 = vector.broadcast %cst_65 : f32 to vector<8x128xf32>
    %153 = arith.mulf %152, %151 : vector<8x128xf32>
    %154 = math.tanh %153 : vector<8x128xf32>
    %cst_66 = arith.constant 5.000000e-01 : f32
    %155 = vector.broadcast %cst_66 : f32 to vector<8x128xf32>
    %156 = arith.mulf %155, %154 : vector<8x128xf32>
    %cst_67 = arith.constant 5.000000e-01 : f32
    %157 = vector.broadcast %cst_67 : f32 to vector<8x128xf32>
    %158 = arith.addf %156, %157 : vector<8x128xf32>
    %159 = arith.mulf %148, %123 : vector<8x128xf32>
    %160 = arith.mulf %140, %150 : vector<8x128xf32>
    %161 = arith.addf %159, %160 : vector<8x128xf32>
    %162 = math.tanh %161 : vector<8x128xf32>
    %163 = arith.mulf %158, %162 : vector<8x128xf32>
    %c4_i32 = arith.constant 4 : i32
    %c8_i32_68 = arith.constant 8 : i32
    %164 = arith.muli %c4_i32, %c8_i32_68 : i32
    %165 = tpu.assume_multiple %164, 8 : i32
    %166 = arith.index_cast %165 : i32 to index
    %c0_69 = arith.constant 0 : index
    %167 = vector.load %arg8[%166, %c0_69] : memref<64x512xf32, #tpu.memory_space<vmem>>, vector<8x512xf32>
    %c0_70 = arith.constant 0 : index
    %c0_71 = arith.constant 0 : index
    %168 = vector.load %arg3[%c0_70, %c0_71] : memref<128x512xf32, #tpu.memory_space<vmem>>, vector<128x512xf32>
    %cst_72 = arith.constant dense<0.000000e+00> : vector<8x512xf32>
    %169 = tpu.matmul %163, %168, %cst_72 {dimension_numbers = #tpu.dot_dimension_numbers<[1], [0], [0], [1], [0, 0, 1, 1], [], []>} : vector<8x128xf32>, vector<128x512xf32>, vector<8x512xf32> -> vector<8x512xf32>
    %170 = arith.addf %167, %169 : vector<8x512xf32>
    %171 = vector.extract_strided_slice %170 {offsets = [0, 0], sizes = [8, 128], strides = [1, 1]} : vector<8x512xf32> to vector<8x128xf32>
    %cst_73 = arith.constant 5.000000e-01 : f32
    %172 = vector.broadcast %cst_73 : f32 to vector<8x128xf32>
    %173 = arith.mulf %172, %171 : vector<8x128xf32>
    %174 = math.tanh %173 : vector<8x128xf32>
    %cst_74 = arith.constant 5.000000e-01 : f32
    %175 = vector.broadcast %cst_74 : f32 to vector<8x128xf32>
    %176 = arith.mulf %175, %174 : vector<8x128xf32>
    %cst_75 = arith.constant 5.000000e-01 : f32
    %177 = vector.broadcast %cst_75 : f32 to vector<8x128xf32>
    %178 = arith.addf %176, %177 : vector<8x128xf32>
    %179 = vector.extract_strided_slice %170 {offsets = [0, 128], sizes = [8, 128], strides = [1, 1]} : vector<8x512xf32> to vector<8x128xf32>
    %cst_76 = arith.constant 5.000000e-01 : f32
    %180 = vector.broadcast %cst_76 : f32 to vector<8x128xf32>
    %181 = arith.mulf %180, %179 : vector<8x128xf32>
    %182 = math.tanh %181 : vector<8x128xf32>
    %cst_77 = arith.constant 5.000000e-01 : f32
    %183 = vector.broadcast %cst_77 : f32 to vector<8x128xf32>
    %184 = arith.mulf %183, %182 : vector<8x128xf32>
    %cst_78 = arith.constant 5.000000e-01 : f32
    %185 = vector.broadcast %cst_78 : f32 to vector<8x128xf32>
    %186 = arith.addf %184, %185 : vector<8x128xf32>
    %187 = vector.extract_strided_slice %170 {offsets = [0, 256], sizes = [8, 128], strides = [1, 1]} : vector<8x512xf32> to vector<8x128xf32>
    %188 = math.tanh %187 : vector<8x128xf32>
    %189 = vector.extract_strided_slice %170 {offsets = [0, 384], sizes = [8, 128], strides = [1, 1]} : vector<8x512xf32> to vector<8x128xf32>
    %cst_79 = arith.constant 5.000000e-01 : f32
    %190 = vector.broadcast %cst_79 : f32 to vector<8x128xf32>
    %191 = arith.mulf %190, %189 : vector<8x128xf32>
    %192 = math.tanh %191 : vector<8x128xf32>
    %cst_80 = arith.constant 5.000000e-01 : f32
    %193 = vector.broadcast %cst_80 : f32 to vector<8x128xf32>
    %194 = arith.mulf %193, %192 : vector<8x128xf32>
    %cst_81 = arith.constant 5.000000e-01 : f32
    %195 = vector.broadcast %cst_81 : f32 to vector<8x128xf32>
    %196 = arith.addf %194, %195 : vector<8x128xf32>
    %197 = arith.mulf %186, %161 : vector<8x128xf32>
    %198 = arith.mulf %178, %188 : vector<8x128xf32>
    %199 = arith.addf %197, %198 : vector<8x128xf32>
    %200 = math.tanh %199 : vector<8x128xf32>
    %201 = arith.mulf %196, %200 : vector<8x128xf32>
    %c5_i32 = arith.constant 5 : i32
    %c8_i32_82 = arith.constant 8 : i32
    %202 = arith.muli %c5_i32, %c8_i32_82 : i32
    %203 = tpu.assume_multiple %202, 8 : i32
    %204 = arith.index_cast %203 : i32 to index
    %c0_83 = arith.constant 0 : index
    %205 = vector.load %arg8[%204, %c0_83] : memref<64x512xf32, #tpu.memory_space<vmem>>, vector<8x512xf32>
    %c0_84 = arith.constant 0 : index
    %c0_85 = arith.constant 0 : index
    %206 = vector.load %arg3[%c0_84, %c0_85] : memref<128x512xf32, #tpu.memory_space<vmem>>, vector<128x512xf32>
    %cst_86 = arith.constant dense<0.000000e+00> : vector<8x512xf32>
    %207 = tpu.matmul %201, %206, %cst_86 {dimension_numbers = #tpu.dot_dimension_numbers<[1], [0], [0], [1], [0, 0, 1, 1], [], []>} : vector<8x128xf32>, vector<128x512xf32>, vector<8x512xf32> -> vector<8x512xf32>
    %208 = arith.addf %205, %207 : vector<8x512xf32>
    %209 = vector.extract_strided_slice %208 {offsets = [0, 0], sizes = [8, 128], strides = [1, 1]} : vector<8x512xf32> to vector<8x128xf32>
    %cst_87 = arith.constant 5.000000e-01 : f32
    %210 = vector.broadcast %cst_87 : f32 to vector<8x128xf32>
    %211 = arith.mulf %210, %209 : vector<8x128xf32>
    %212 = math.tanh %211 : vector<8x128xf32>
    %cst_88 = arith.constant 5.000000e-01 : f32
    %213 = vector.broadcast %cst_88 : f32 to vector<8x128xf32>
    %214 = arith.mulf %213, %212 : vector<8x128xf32>
    %cst_89 = arith.constant 5.000000e-01 : f32
    %215 = vector.broadcast %cst_89 : f32 to vector<8x128xf32>
    %216 = arith.addf %214, %215 : vector<8x128xf32>
    %217 = vector.extract_strided_slice %208 {offsets = [0, 128], sizes = [8, 128], strides = [1, 1]} : vector<8x512xf32> to vector<8x128xf32>
    %cst_90 = arith.constant 5.000000e-01 : f32
    %218 = vector.broadcast %cst_90 : f32 to vector<8x128xf32>
    %219 = arith.mulf %218, %217 : vector<8x128xf32>
    %220 = math.tanh %219 : vector<8x128xf32>
    %cst_91 = arith.constant 5.000000e-01 : f32
    %221 = vector.broadcast %cst_91 : f32 to vector<8x128xf32>
    %222 = arith.mulf %221, %220 : vector<8x128xf32>
    %cst_92 = arith.constant 5.000000e-01 : f32
    %223 = vector.broadcast %cst_92 : f32 to vector<8x128xf32>
    %224 = arith.addf %222, %223 : vector<8x128xf32>
    %225 = vector.extract_strided_slice %208 {offsets = [0, 256], sizes = [8, 128], strides = [1, 1]} : vector<8x512xf32> to vector<8x128xf32>
    %226 = math.tanh %225 : vector<8x128xf32>
    %227 = vector.extract_strided_slice %208 {offsets = [0, 384], sizes = [8, 128], strides = [1, 1]} : vector<8x512xf32> to vector<8x128xf32>
    %cst_93 = arith.constant 5.000000e-01 : f32
    %228 = vector.broadcast %cst_93 : f32 to vector<8x128xf32>
    %229 = arith.mulf %228, %227 : vector<8x128xf32>
    %230 = math.tanh %229 : vector<8x128xf32>
    %cst_94 = arith.constant 5.000000e-01 : f32
    %231 = vector.broadcast %cst_94 : f32 to vector<8x128xf32>
    %232 = arith.mulf %231, %230 : vector<8x128xf32>
    %cst_95 = arith.constant 5.000000e-01 : f32
    %233 = vector.broadcast %cst_95 : f32 to vector<8x128xf32>
    %234 = arith.addf %232, %233 : vector<8x128xf32>
    %235 = arith.mulf %224, %199 : vector<8x128xf32>
    %236 = arith.mulf %216, %226 : vector<8x128xf32>
    %237 = arith.addf %235, %236 : vector<8x128xf32>
    %238 = math.tanh %237 : vector<8x128xf32>
    %239 = arith.mulf %234, %238 : vector<8x128xf32>
    %c6_i32 = arith.constant 6 : i32
    %c8_i32_96 = arith.constant 8 : i32
    %240 = arith.muli %c6_i32, %c8_i32_96 : i32
    %241 = tpu.assume_multiple %240, 8 : i32
    %242 = arith.index_cast %241 : i32 to index
    %c0_97 = arith.constant 0 : index
    %243 = vector.load %arg8[%242, %c0_97] : memref<64x512xf32, #tpu.memory_space<vmem>>, vector<8x512xf32>
    %c0_98 = arith.constant 0 : index
    %c0_99 = arith.constant 0 : index
    %244 = vector.load %arg3[%c0_98, %c0_99] : memref<128x512xf32, #tpu.memory_space<vmem>>, vector<128x512xf32>
    %cst_100 = arith.constant dense<0.000000e+00> : vector<8x512xf32>
    %245 = tpu.matmul %239, %244, %cst_100 {dimension_numbers = #tpu.dot_dimension_numbers<[1], [0], [0], [1], [0, 0, 1, 1], [], []>} : vector<8x128xf32>, vector<128x512xf32>, vector<8x512xf32> -> vector<8x512xf32>
    %246 = arith.addf %243, %245 : vector<8x512xf32>
    %247 = vector.extract_strided_slice %246 {offsets = [0, 0], sizes = [8, 128], strides = [1, 1]} : vector<8x512xf32> to vector<8x128xf32>
    %cst_101 = arith.constant 5.000000e-01 : f32
    %248 = vector.broadcast %cst_101 : f32 to vector<8x128xf32>
    %249 = arith.mulf %248, %247 : vector<8x128xf32>
    %250 = math.tanh %249 : vector<8x128xf32>
    %cst_102 = arith.constant 5.000000e-01 : f32
    %251 = vector.broadcast %cst_102 : f32 to vector<8x128xf32>
    %252 = arith.mulf %251, %250 : vector<8x128xf32>
    %cst_103 = arith.constant 5.000000e-01 : f32
    %253 = vector.broadcast %cst_103 : f32 to vector<8x128xf32>
    %254 = arith.addf %252, %253 : vector<8x128xf32>
    %255 = vector.extract_strided_slice %246 {offsets = [0, 128], sizes = [8, 128], strides = [1, 1]} : vector<8x512xf32> to vector<8x128xf32>
    %cst_104 = arith.constant 5.000000e-01 : f32
    %256 = vector.broadcast %cst_104 : f32 to vector<8x128xf32>
    %257 = arith.mulf %256, %255 : vector<8x128xf32>
    %258 = math.tanh %257 : vector<8x128xf32>
    %cst_105 = arith.constant 5.000000e-01 : f32
    %259 = vector.broadcast %cst_105 : f32 to vector<8x128xf32>
    %260 = arith.mulf %259, %258 : vector<8x128xf32>
    %cst_106 = arith.constant 5.000000e-01 : f32
    %261 = vector.broadcast %cst_106 : f32 to vector<8x128xf32>
    %262 = arith.addf %260, %261 : vector<8x128xf32>
    %263 = vector.extract_strided_slice %246 {offsets = [0, 256], sizes = [8, 128], strides = [1, 1]} : vector<8x512xf32> to vector<8x128xf32>
    %264 = math.tanh %263 : vector<8x128xf32>
    %265 = vector.extract_strided_slice %246 {offsets = [0, 384], sizes = [8, 128], strides = [1, 1]} : vector<8x512xf32> to vector<8x128xf32>
    %cst_107 = arith.constant 5.000000e-01 : f32
    %266 = vector.broadcast %cst_107 : f32 to vector<8x128xf32>
    %267 = arith.mulf %266, %265 : vector<8x128xf32>
    %268 = math.tanh %267 : vector<8x128xf32>
    %cst_108 = arith.constant 5.000000e-01 : f32
    %269 = vector.broadcast %cst_108 : f32 to vector<8x128xf32>
    %270 = arith.mulf %269, %268 : vector<8x128xf32>
    %cst_109 = arith.constant 5.000000e-01 : f32
    %271 = vector.broadcast %cst_109 : f32 to vector<8x128xf32>
    %272 = arith.addf %270, %271 : vector<8x128xf32>
    %273 = arith.mulf %262, %237 : vector<8x128xf32>
    %274 = arith.mulf %254, %264 : vector<8x128xf32>
    %275 = arith.addf %273, %274 : vector<8x128xf32>
    %276 = math.tanh %275 : vector<8x128xf32>
    %277 = arith.mulf %272, %276 : vector<8x128xf32>
    %c7_i32 = arith.constant 7 : i32
    %c8_i32_110 = arith.constant 8 : i32
    %278 = arith.muli %c7_i32, %c8_i32_110 : i32
    %279 = tpu.assume_multiple %278, 8 : i32
    %280 = arith.index_cast %279 : i32 to index
    %c0_111 = arith.constant 0 : index
    %281 = vector.load %arg8[%280, %c0_111] : memref<64x512xf32, #tpu.memory_space<vmem>>, vector<8x512xf32>
    %c0_112 = arith.constant 0 : index
    %c0_113 = arith.constant 0 : index
    %282 = vector.load %arg3[%c0_112, %c0_113] : memref<128x512xf32, #tpu.memory_space<vmem>>, vector<128x512xf32>
    %cst_114 = arith.constant dense<0.000000e+00> : vector<8x512xf32>
    %283 = tpu.matmul %277, %282, %cst_114 {dimension_numbers = #tpu.dot_dimension_numbers<[1], [0], [0], [1], [0, 0, 1, 1], [], []>} : vector<8x128xf32>, vector<128x512xf32>, vector<8x512xf32> -> vector<8x512xf32>
    %284 = arith.addf %281, %283 : vector<8x512xf32>
    %285 = vector.extract_strided_slice %284 {offsets = [0, 0], sizes = [8, 128], strides = [1, 1]} : vector<8x512xf32> to vector<8x128xf32>
    %cst_115 = arith.constant 5.000000e-01 : f32
    %286 = vector.broadcast %cst_115 : f32 to vector<8x128xf32>
    %287 = arith.mulf %286, %285 : vector<8x128xf32>
    %288 = math.tanh %287 : vector<8x128xf32>
    %cst_116 = arith.constant 5.000000e-01 : f32
    %289 = vector.broadcast %cst_116 : f32 to vector<8x128xf32>
    %290 = arith.mulf %289, %288 : vector<8x128xf32>
    %cst_117 = arith.constant 5.000000e-01 : f32
    %291 = vector.broadcast %cst_117 : f32 to vector<8x128xf32>
    %292 = arith.addf %290, %291 : vector<8x128xf32>
    %293 = vector.extract_strided_slice %284 {offsets = [0, 128], sizes = [8, 128], strides = [1, 1]} : vector<8x512xf32> to vector<8x128xf32>
    %cst_118 = arith.constant 5.000000e-01 : f32
    %294 = vector.broadcast %cst_118 : f32 to vector<8x128xf32>
    %295 = arith.mulf %294, %293 : vector<8x128xf32>
    %296 = math.tanh %295 : vector<8x128xf32>
    %cst_119 = arith.constant 5.000000e-01 : f32
    %297 = vector.broadcast %cst_119 : f32 to vector<8x128xf32>
    %298 = arith.mulf %297, %296 : vector<8x128xf32>
    %cst_120 = arith.constant 5.000000e-01 : f32
    %299 = vector.broadcast %cst_120 : f32 to vector<8x128xf32>
    %300 = arith.addf %298, %299 : vector<8x128xf32>
    %301 = vector.extract_strided_slice %284 {offsets = [0, 256], sizes = [8, 128], strides = [1, 1]} : vector<8x512xf32> to vector<8x128xf32>
    %302 = math.tanh %301 : vector<8x128xf32>
    %303 = vector.extract_strided_slice %284 {offsets = [0, 384], sizes = [8, 128], strides = [1, 1]} : vector<8x512xf32> to vector<8x128xf32>
    %cst_121 = arith.constant 5.000000e-01 : f32
    %304 = vector.broadcast %cst_121 : f32 to vector<8x128xf32>
    %305 = arith.mulf %304, %303 : vector<8x128xf32>
    %306 = math.tanh %305 : vector<8x128xf32>
    %cst_122 = arith.constant 5.000000e-01 : f32
    %307 = vector.broadcast %cst_122 : f32 to vector<8x128xf32>
    %308 = arith.mulf %307, %306 : vector<8x128xf32>
    %cst_123 = arith.constant 5.000000e-01 : f32
    %309 = vector.broadcast %cst_123 : f32 to vector<8x128xf32>
    %310 = arith.addf %308, %309 : vector<8x128xf32>
    %311 = arith.mulf %300, %275 : vector<8x128xf32>
    %312 = arith.mulf %292, %302 : vector<8x128xf32>
    %313 = arith.addf %311, %312 : vector<8x128xf32>
    %314 = math.tanh %313 : vector<8x128xf32>
    %315 = arith.mulf %310, %314 : vector<8x128xf32>
    %c8_i32_124 = arith.constant 8 : i32
    %c0_125 = arith.constant 0 : index
    %c0_126 = arith.constant 0 : index
    %316 = vector.load %arg9[%c0_125, %c0_126] : memref<8x128xf32, #tpu.memory_space<vmem>>, vector<8x128xf32>
    tpu.vector_store %arg9[%c0_125, %c0_126], %315 {strides = array<i32>} : memref<8x128xf32, #tpu.memory_space<vmem>>, vector<8x128xf32>,
    %c0_127 = arith.constant 0 : index
    %c0_128 = arith.constant 0 : index
    %317 = vector.load %arg10[%c0_127, %c0_128] : memref<8x128xf32, #tpu.memory_space<vmem>>, vector<8x128xf32>
    tpu.vector_store %arg10[%c0_127, %c0_128], %313 {strides = array<i32>} : memref<8x128xf32, #tpu.memory_space<vmem>>, vector<8x128xf32>,
    %c0_i32_129 = arith.constant 0 : i32
    %318 = arith.cmpi eq, %arg0, %c0_i32_129 : i32
    %319 = arith.extui %318 : i1 to i32
    %c0_i32_130 = arith.constant 0 : i32
    %320 = arith.cmpi ne, %319, %c0_i32_130 : i32
    scf.if %320 {
      %c0_131 = arith.constant 0 : index
      %c0_132 = arith.constant 0 : index
      %321 = vector.load %arg5[%c0_131, %c0_132] : memref<128x128xf32, #tpu.memory_space<vmem>>, vector<128x128xf32>
      %cst_133 = arith.constant dense<0.000000e+00> : vector<8x128xf32>
      %322 = tpu.matmul %315, %321, %cst_133 {dimension_numbers = #tpu.dot_dimension_numbers<[1], [0], [0], [1], [0, 0, 1, 1], [], []>} : vector<8x128xf32>, vector<128x128xf32>, vector<8x128xf32> -> vector<8x128xf32>
      %c0_134 = arith.constant 0 : index
      %c0_135 = arith.constant 0 : index
      %323 = vector.load %arg6[%c0_134, %c0_135] : memref<1x128xf32, #tpu.memory_space<vmem>>, vector<1x128xf32>
      %324 = vector.broadcast %323 : vector<1x128xf32> to vector<8x128xf32>
      %325 = arith.addf %322, %324 : vector<8x128xf32>
      %c0_136 = arith.constant 0 : index
      %c0_137 = arith.constant 0 : index
      %326 = vector.load %arg7[%c0_136, %c0_137] : memref<8x128xf32, #tpu.memory_space<vmem>>, vector<8x128xf32>
      tpu.vector_store %arg7[%c0_136, %c0_137], %325 {strides = array<i32>} : memref<8x128xf32, #tpu.memory_space<vmem>>, vector<8x128xf32>,
    } else {
    }
    return
  }
  func.func @transform_0(%arg0: i32) -> (i32, i32) {
    %c0_i32 = arith.constant 0 : i32
    %c0_i32_0 = arith.constant 0 : i32
    return %arg0, %c0_i32 : i32, i32
  }
  func.func @transform_1(%arg0: i32) -> (i32, i32) {
    %c0_i32 = arith.constant 0 : i32
    %c0_i32_0 = arith.constant 0 : i32
    %c0_i32_1 = arith.constant 0 : i32
    return %c0_i32, %c0_i32_0 : i32, i32
  }
  func.func @transform_2(%arg0: i32) -> (i32, i32) {
    %c0_i32 = arith.constant 0 : i32
    %c0_i32_0 = arith.constant 0 : i32
    %c0_i32_1 = arith.constant 0 : i32
    return %c0_i32, %c0_i32_0 : i32, i32
  }
  func.func @transform_3(%arg0: i32) -> (i32, i32) {
    %c0_i32 = arith.constant 0 : i32
    %c0_i32_0 = arith.constant 0 : i32
    %c0_i32_1 = arith.constant 0 : i32
    return %c0_i32, %c0_i32_0 : i32, i32
  }
  func.func @transform_4(%arg0: i32) -> (i32, i32) {
    %c0_i32 = arith.constant 0 : i32
    %c0_i32_0 = arith.constant 0 : i32
    %c0_i32_1 = arith.constant 0 : i32
    return %c0_i32, %c0_i32_0 : i32, i32
  }
  func.func @transform_5(%arg0: i32) -> (i32, i32) {
    %c0_i32 = arith.constant 0 : i32
    %c0_i32_0 = arith.constant 0 : i32
    %c0_i32_1 = arith.constant 0 : i32
    return %c0_i32, %c0_i32_0 : i32, i32
  }
  func.func @transform_6(%arg0: i32) -> (i32, i32) {
    %c0_i32 = arith.constant 0 : i32
    %c0_i32_0 = arith.constant 0 : i32
    %c0_i32_1 = arith.constant 0 : i32
    return %c0_i32, %c0_i32_0 : i32, i32
  }
}

</mosaic_0001>

<llo_original>
// kernel: _deepar_forward_impl.1
$region0: #{_deepar_forward_impl.1}
  #allocation0 [shape = 'u32[]', space=smem, size = 0x4, offset = 0x4, fixed_abs, tag = 'smem constant byte address 0x4 - core index']
  #allocation1 [shape = 'u32[144,128]{1,0:T(1,128)}', space=vmem, size = 0x12000, scoped, tag = 'internal scratch']
  #allocation2 [shape = 'f32[64,512]{1,0:T(8,128)}', space=vmem, size = 0x20000, scoped, tag = 'scratch operand']
  #allocation3 [shape = 'f32[8,128]{1,0:T(8,128)}', space=vmem, size = 0x1000, scoped, tag = 'scratch operand']
  #allocation4 [shape = 'f32[8,128]{1,0:T(8,128)}', space=vmem, size = 0x1000, scoped, tag = 'scratch operand']
  %s0 = inlined_call_operand.vmem [shape: f32[64,128], index: 0, kind: input, shape index: {}]
  %s1 = inlined_call_operand.vmem [shape: f32[128,512], index: 1, kind: input, shape index: {}]
  %s2 = inlined_call_operand.vmem [shape: f32[128,512], index: 2, kind: input, shape index: {}]
  %s3 = inlined_call_operand.vmem [shape: f32[1,512], index: 3, kind: input, shape index: {}]
  %s4 = inlined_call_operand.vmem [shape: f32[128,128], index: 4, kind: input, shape index: {}]
  %s5 = inlined_call_operand.vmem [shape: f32[1,128], index: 5, kind: input, shape index: {}]
  %s6 = inlined_call_operand.vmem [shape: f32[8,128], index: 6, kind: output, shape index: {}]
  %s7 = sld [smem:[#allocation0]]
  $region42: #{_deepar_forward_impl.1} parent=0
    _
  %s9 = ssub.s32 1, %s7
  %s10 = scalar_select 0, %s9, %s7
  // Predicated region
  $region2: #{_deepar_forward_impl.1} parent=0 // pred_check
    _
  $region3: #{_deepar_forward_impl.1} parent=0 // pred_check_branch
    %12 = sbr.rel (0) target = $region5
  $region4: #{_deepar_forward_impl.1} parent=0 // pred_region
    _
  $region5: #{_deepar_forward_impl.1} parent=0 // pred_fallthru
    _
  // Predicated region
  $region6: #{_deepar_forward_impl.1} parent=0 // pred_check
    _
  $region7: #{_deepar_forward_impl.1} parent=0 // pred_check_branch
    %14 = sbr.rel (0) target = $region9
  $region8: #{_deepar_forward_impl.1} parent=0 // pred_region
    _
  $region9: #{_deepar_forward_impl.1} parent=0 // pred_fallthru
    _
  // Predicated region
  $region10: #{_deepar_forward_impl.1} parent=0 // pred_check
    _
  $region11: #{_deepar_forward_impl.1} parent=0 // pred_check_branch
    %16 = sbr.rel (0) target = $region13
  $region12: #{_deepar_forward_impl.1} parent=0 // pred_region
    _
  $region13: #{_deepar_forward_impl.1} parent=0 // pred_fallthru
    _
  // Predicated region
  $region14: #{_deepar_forward_impl.1} parent=0 // pred_check
    _
  $region15: #{_deepar_forward_impl.1} parent=0 // pred_check_branch
    %18 = sbr.rel (0) target = $region17
  $region16: #{_deepar_forward_impl.1} parent=0 // pred_region
    _
  $region17: #{_deepar_forward_impl.1} parent=0 // pred_fallthru
    _
  // Predicated region
  $region18: #{_deepar_forward_impl.1} parent=0 // pred_check
    _
  $region19: #{_deepar_forward_impl.1} parent=0 // pred_check_branch
    %20 = sbr.rel (0) target = $region21
  $region20: #{_deepar_forward_impl.1} parent=0 // pred_region
    _
  $region21: #{_deepar_forward_impl.1} parent=0 // pred_fallthru
    _
  // Predicated region
  $region22: #{_deepar_forward_impl.1} parent=0 // pred_check
    _
  $region23: #{_deepar_forward_impl.1} parent=0 // pred_check_branch
    %22 = sbr.rel (0) target = $region25
  $region24: #{_deepar_forward_impl.1} parent=0 // pred_region
    _
  $region25: #{_deepar_forward_impl.1} parent=0 // pred_fallthru
    _
  %p23 = scmp.eq.s32.totalorder 0, 0
  // Predicated region
  $region26: #{_deepar_forward_impl.1} parent=0 // pred_check
    %p24 = pneg %p23
  $region27: #{_deepar_forward_impl.1} parent=0 // pred_check_branch
    %26 = sbr.rel (%p24) target = $region29
  $region28: #{_deepar_forward_impl.1} parent=0 // pred_region
    %27 = vst [vmem:[#allocation3] sm:$0xff] 0.0
    %28 = vst [vmem:[#allocation4] sm:$0xff] 0.0
  $region29: #{_deepar_forward_impl.1} parent=0 // pred_fallthru
    _
  %v29 = vld [vmem:[%s0] sm:$0xff]
  %v30 = vld [vmem:[%s0 + $0x8] sm:$0xff]
  %v31 = vld [vmem:[%s0 + $0x10] sm:$0xff]
  %v32 = vld [vmem:[%s0 + $0x18] sm:$0xff]
  %v33 = vld [vmem:[%s0 + $0x20] sm:$0xff]
  %v34 = vld [vmem:[%s0 + $0x28] sm:$0xff]
  %v35 = vld [vmem:[%s0 + $0x30] sm:$0xff]
  %v36 = vld [vmem:[%s0 + $0x38] sm:$0xff]
  %v37 = vld [vmem:[%s1] sm:$0xff]
  %v38 = vld [vmem:[%s1 + $0x8] sm:$0xff]
  %v39 = vld [vmem:[%s1 + $0x10] sm:$0xff]
  %v40 = vld [vmem:[%s1 + $0x18] sm:$0xff]
  %v41 = vld [vmem:[%s1 + $0x20] sm:$0xff]
  %v42 = vld [vmem:[%s1 + $0x28] sm:$0xff]
  %v43 = vld [vmem:[%s1 + $0x30] sm:$0xff]
  %v44 = vld [vmem:[%s1 + $0x38] sm:$0xff]
  %v45 = vld [vmem:[%s1 + $0x40] sm:$0xff]
  %v46 = vld [vmem:[%s1 + $0x48] sm:$0xff]
  %v47 = vld [vmem:[%s1 + $0x50] sm:$0xff]
  %v48 = vld [vmem:[%s1 + $0x58] sm:$0xff]
  %v49 = vld [vmem:[%s1 + $0x60] sm:$0xff]
  %v50 = vld [vmem:[%s1 + $0x68] sm:$0xff]
  %v51 = vld [vmem:[%s1 + $0x70] sm:$0xff]
  %v52 = vld [vmem:[%s1 + $0x78] sm:$0xff]
  %v53 = vld [vmem:[%s1 + $0x80] sm:$0xff]
  %v54 = vld [vmem:[%s1 + $0x88] sm:$0xff]
  %v55 = vld [vmem:[%s1 + $0x90] sm:$0xff]
  %v56 = vld [vmem:[%s1 + $0x98] sm:$0xff]
  %v57 = vld [vmem:[%s1 + $0xa0] sm:$0xff]
  %v58 = vld [vmem:[%s1 + $0xa8] sm:$0xff]
  %v59 = vld [vmem:[%s1 + $0xb0] sm:$0xff]
  %v60 = vld [vmem:[%s1 + $0xb8] sm:$0xff]
  %v61 = vld [vmem:[%s1 + $0xc0] sm:$0xff]
  %v62 = vld [vmem:[%s1 + $0xc8] sm:$0xff]
  %v63 = vld [vmem:[%s1 + $0xd0] sm:$0xff]
  %v64 = vld [vmem:[%s1 + $0xd8] sm:$0xff]
  %v65 = vld [vmem:[%s1 + $0xe0] sm:$0xff]
  %v66 = vld [vmem:[%s1 + $0xe8] sm:$0xff]
  %v67 = vld [vmem:[%s1 + $0xf0] sm:$0xff]
  %v68 = vld [vmem:[%s1 + $0xf8] sm:$0xff]
  %v69 = vld [vmem:[%s1 + $0x100] sm:$0xff]
  %v70 = vld [vmem:[%s1 + $0x108] sm:$0xff]
  %v71 = vld [vmem:[%s1 + $0x110] sm:$0xff]
  %v72 = vld [vmem:[%s1 + $0x118] sm:$0xff]
  %v73 = vld [vmem:[%s1 + $0x120] sm:$0xff]
  %v74 = vld [vmem:[%s1 + $0x128] sm:$0xff]
  %v75 = vld [vmem:[%s1 + $0x130] sm:$0xff]
  %v76 = vld [vmem:[%s1 + $0x138] sm:$0xff]
  %v77 = vld [vmem:[%s1 + $0x140] sm:$0xff]
  %v78 = vld [vmem:[%s1 + $0x148] sm:$0xff]
  %v79 = vld [vmem:[%s1 + $0x150] sm:$0xff]
  %v80 = vld [vmem:[%s1 + $0x158] sm:$0xff]
  %v81 = vld [vmem:[%s1 + $0x160] sm:$0xff]
  %v82 = vld [vmem:[%s1 + $0x168] sm:$0xff]
  %v83 = vld [vmem:[%s1 + $0x170] sm:$0xff]
  %v84 = vld [vmem:[%s1 + $0x178] sm:$0xff]
  %v85 = vld [vmem:[%s1 + $0x180] sm:$0xff]
  %v86 = vld [vmem:[%s1 + $0x188] sm:$0xff]
  %v87 = vld [vmem:[%s1 + $0x190] sm:$0xff]
  %v88 = vld [vmem:[%s1 + $0x198] sm:$0xff]
  %v89 = vld [vmem:[%s1 + $0x1a0] sm:$0xff]
  %v90 = vld [vmem:[%s1 + $0x1a8] sm:$0xff]
  %v91 = vld [vmem:[%s1 + $0x1b0] sm:$0xff]
  %v92 = vld [vmem:[%s1 + $0x1b8] sm:$0xff]
  %v93 = vld [vmem:[%s1 + $0x1c0] sm:$0xff]
  %v94 = vld [vmem:[%s1 + $0x1c8] sm:$0xff]
  %v95 = vld [vmem:[%s1 + $0x1d0] sm:$0xff]
  %v96 = vld [vmem:[%s1 + $0x1d8] sm:$0xff]
  %v97 = vld [vmem:[%s1 + $0x1e0] sm:$0xff]
  %v98 = vld [vmem:[%s1 + $0x1e8] sm:$0xff]
  %v99 = vld [vmem:[%s1 + $0x1f0] sm:$0xff]
  %v100 = vld [vmem:[%s1 + $0x1f8] sm:$0xff]
  %v101 = vld [vmem:[%s3] sm:$0xf]
  %v103 = vlaneseq
  %v104 = vshrl.u32 %v103, 7
  %v105 = vsub.s32 0, %v104
  %v106 = vrot.slane %v101, %v105
  %v107 = vlaneseq
  %v108 = vshrl.u32 %v107, 7
  %v109 = vsub.s32 1, %v108
  %v110 = vrot.slane %v101, %v109
  %v111 = vlaneseq
  %v112 = vshrl.u32 %v111, 7
  %v113 = vsub.s32 2, %v112
  %v114 = vrot.slane %v101, %v113
  %v115 = vlaneseq
  %v116 = vshrl.u32 %v115, 7
  %v117 = vsub.s32 3, %v116
  %v118 = vrot.slane %v101, %v117
  %123 = vmatprep.subr.mxu0 %v98
  %124 = vmatpush1.msra.mxu0 %v97
  %125 = vmatprep.subr.mxu0 %v94
  %126 = vmatpush1.msra.mxu0 %v93
  %127 = vmatprep.subr.mxu0 %v90
  %128 = vmatpush1.msra.mxu0 %v89
  %129 = vmatprep.subr.mxu0 %v86
  %130 = vmatpush1.msra.mxu0 %v85
  %131 = vmatprep.subr.mxu0 %v82
  %132 = vmatpush1.msra.mxu0 %v81
  %133 = vmatprep.subr.mxu0 %v78
  %134 = vmatpush1.msra.mxu0 %v77
  %135 = vmatprep.subr.mxu0 %v74
  %136 = vmatpush1.msra.mxu0 %v73
  %137 = vmatprep.subr.mxu0 %v70
  %138 = vmatpush1.msra.mxu0 %v69
  %139 = vmatprep.subr.mxu0 %v66
  %140 = vmatpush1.msra.mxu0 %v65
  %141 = vmatprep.subr.mxu0 %v62
  %142 = vmatpush1.msra.mxu0 %v61
  %143 = vmatprep.subr.mxu0 %v58
  %144 = vmatpush1.msra.mxu0 %v57
  %145 = vmatprep.subr.mxu0 %v54
  %146 = vmatpush1.msra.mxu0 %v53
  %147 = vmatprep.subr.mxu0 %v50
  %148 = vmatpush1.msra.mxu0 %v49
  %149 = vmatprep.subr.mxu0 %v46
  %150 = vmatpush1.msra.mxu0 %v45
  %151 = vmatprep.subr.mxu0 %v42
  %152 = vmatpush1.msra.mxu0 %v41
  %153 = vmatprep.subr.mxu0 %v38
  %154 = vmatpush1.msra.mxu0 %v37
  %155 = vmatprep.subr.mxu0 0.0
  %156 = vmatpush2.msra.mxu0 0.0
  %157 = vmatprep.subr.mxu0 0.0
  %158 = vmatpush2.msra.mxu0 0.0
  %159 = vmatprep.subr.mxu0 0.0
  %160 = vmatpush2.msra.mxu0 0.0
  %161 = vmatprep.subr.mxu0 0.0
  %162 = vmatpush2.msra.mxu0 0.0
  %163 = vmatprep.subr.mxu0 0.0
  %164 = vmatpush2.msra.mxu0 0.0
  %165 = vmatprep.subr.mxu0 0.0
  %166 = vmatpush2.msra.mxu0 0.0
  %167 = vmatprep.subr.mxu0 0.0
  %168 = vmatpush2.msra.mxu0 0.0
  %169 = vmatprep.subr.mxu0 0.0
  %170 = vmatpush2.msra.mxu0 0.0
  %171 = vmatprep.subr.mxu0 0.0
  %172 = vmatpush2.msra.mxu0 0.0
  %173 = vmatprep.subr.mxu0 0.0
  %174 = vmatpush2.msra.mxu0 0.0
  %175 = vmatprep.subr.mxu0 0.0
  %176 = vmatpush2.msra.mxu0 0.0
  %177 = vmatprep.subr.mxu0 0.0
  %178 = vmatpush2.msra.mxu0 0.0
  %179 = vmatprep.subr.mxu0 0.0
  %180 = vmatpush2.msra.mxu0 0.0
  %181 = vmatprep.subr.mxu0 0.0
  %182 = vmatpush2.msra.mxu0 0.0
  %183 = vmatprep.subr.mxu0 0.0
  %184 = vmatpush2.msra.mxu0 0.0
  %185 = vmatprep.subr.mxu0 0.0
  %186 = vmatpush2.msra.mxu0 0.0
  %187 = vmatprep.mubr.f32.mxu0 0.0
  %188 = vmatmul.mubr.f32.gmra.mxu0 %v29
  %v189 = vpop.f32.mrf.mxu0
  %v190 = vadd.f32 %v106, %v189
  %v191 = vpop.f32.mrf.mxu0
  %v192 = vadd.f32 %v110, %v191
  %193 = vmatprep.mubr.f32.mxu0 0.0
  %194 = vmatmul.mubr.f32.gmra.mxu0 %v30
  %v195 = vpop.f32.mrf.mxu0
  %v196 = vadd.f32 %v106, %v195
  %v197 = vpop.f32.mrf.mxu0
  %v198 = vadd.f32 %v110, %v197
  %199 = vmatprep.mubr.f32.mxu0 0.0
  %200 = vmatmul.mubr.f32.gmra.mxu0 %v31
  %v201 = vpop.f32.mrf.mxu0
  %v202 = vadd.f32 %v106, %v201
  %v203 = vpop.f32.mrf.mxu0
  %v204 = vadd.f32 %v110, %v203
  %205 = vmatprep.mubr.f32.mxu0 0.0
  %206 = vmatmul.mubr.f32.gmra.mxu0 %v32
  %v207 = vpop.f32.mrf.mxu0
  %v208 = vadd.f32 %v106, %v207
  %v209 = vpop.f32.mrf.mxu0
  %v210 = vadd.f32 %v110, %v209
  %211 = vmatprep.mubr.f32.mxu0 0.0
  %212 = vmatmul.mubr.f32.gmra.mxu0 %v33
  %v213 = vpop.f32.mrf.mxu0
  %v214 = vadd.f32 %v106, %v213
  %v215 = vpop.f32.mrf.mxu0
  %v216 = vadd.f32 %v110, %v215
  %217 = vmatprep.mubr.f32.mxu0 0.0
  %218 = vmatmul.mubr.f32.gmra.mxu0 %v34
  %v219 = vpop.f32.mrf.mxu0
  %v220 = vadd.f32 %v106, %v219
  %v221 = vpop.f32.mrf.mxu0
  %v222 = vadd.f32 %v110, %v221
  %223 = vmatprep.mubr.f32.mxu0 0.0
  %224 = vmatmul.mubr.f32.gmra.mxu0 %v35
  %v225 = vpop.f32.mrf.mxu0
  %v226 = vadd.f32 %v106, %v225
  %v227 = vpop.f32.mrf.mxu0
  %v228 = vadd.f32 %v110, %v227
  %229 = vmatprep.mubr.f32.mxu0 0.0
  %230 = vmatmul.mubr.f32.gmra.mxu0 %v36
  %v231 = vpop.f32.mrf.mxu0
  %v232 = vadd.f32 %v106, %v231
  %v233 = vpop.f32.mrf.mxu0
  %v234 = vadd.f32 %v110, %v233
  %235 = vdwg.mxu0
  %236 = vmatprep.subr.mxu0 %v100
  %237 = vmatpush1.msra.mxu0 %v99
  %238 = vmatprep.subr.mxu0 %v96
  %239 = vmatpush1.msra.mxu0 %v95
  %240 = vmatprep.subr.mxu0 %v92
  %241 = vmatpush1.msra.mxu0 %v91
  %242 = vmatprep.subr.mxu0 %v88
  %243 = vmatpush1.msra.mxu0 %v87
  %244 = vmatprep.subr.mxu0 %v84
  %245 = vmatpush1.msra.mxu0 %v83
  %246 = vmatprep.subr.mxu0 %v80
  %247 = vmatpush1.msra.mxu0 %v79
  %248 = vmatprep.subr.mxu0 %v76
  %249 = vmatpush1.msra.mxu0 %v75
  %250 = vmatprep.subr.mxu0 %v72
  %251 = vmatpush1.msra.mxu0 %v71
  %252 = vmatprep.subr.mxu0 %v68
  %253 = vmatpush1.msra.mxu0 %v67
  %254 = vmatprep.subr.mxu0 %v64
  %255 = vmatpush1.msra.mxu0 %v63
  %256 = vmatprep.subr.mxu0 %v60
  %257 = vmatpush1.msra.mxu0 %v59
  %258 = vmatprep.subr.mxu0 %v56
  %259 = vmatpush1.msra.mxu0 %v55
  %260 = vmatprep.subr.mxu0 %v52
  %261 = vmatpush1.msra.mxu0 %v51
  %262 = vmatprep.subr.mxu0 %v48
  %263 = vmatpush1.msra.mxu0 %v47
  %264 = vmatprep.subr.mxu0 %v44
  %265 = vmatpush1.msra.mxu0 %v43
  %266 = vmatprep.subr.mxu0 %v40
  %267 = vmatpush1.msra.mxu0 %v39
  %268 = vmatprep.subr.mxu0 0.0
  %269 = vmatpush2.msra.mxu0 0.0
  %270 = vmatprep.subr.mxu0 0.0
  %271 = vmatpush2.msra.mxu0 0.0
  %272 = vmatprep.subr.mxu0 0.0
  %273 = vmatpush2.msra.mxu0 0.0
  %274 = vmatprep.subr.mxu0 0.0
  %275 = vmatpush2.msra.mxu0 0.0
  %276 = vmatprep.subr.mxu0 0.0
  %277 = vmatpush2.msra.mxu0 0.0
  %278 = vmatprep.subr.mxu0 0.0
  %279 = vmatpush2.msra.mxu0 0.0
  %280 = vmatprep.subr.mxu0 0.0
  %281 = vmatpush2.msra.mxu0 0.0
  %282 = vmatprep.subr.mxu0 0.0
  %283 = vmatpush2.msra.mxu0 0.0
  %284 = vmatprep.subr.mxu0 0.0
  %285 = vmatpush2.msra.mxu0 0.0
  %286 = vmatprep.subr.mxu0 0.0
  %287 = vmatpush2.msra.mxu0 0.0
  %288 = vmatprep.subr.mxu0 0.0
  %289 = vmatpush2.msra.mxu0 0.0
  %290 = vmatprep.subr.mxu0 0.0
  %291 = vmatpush2.msra.mxu0 0.0
  %292 = vmatprep.subr.mxu0 0.0
  %293 = vmatpush2.msra.mxu0 0.0
  %294 = vmatprep.subr.mxu0 0.0
  %295 = vmatpush2.msra.mxu0 0.0
  %296 = vmatprep.subr.mxu0 0.0
  %297 = vmatpush2.msra.mxu0 0.0
  %298 = vmatprep.subr.mxu0 0.0
  %299 = vmatpush2.msra.mxu0 0.0
  %300 = vmatprep.mubr.f32.mxu0 0.0
  %301 = vmatmul.mubr.f32.gmra.mxu0 %v29
  %v302 = vpop.f32.mrf.mxu0
  %v303 = vadd.f32 %v114, %v302
  %v304 = vpop.f32.mrf.mxu0
  %v305 = vadd.f32 %v118, %v304
  %306 = vmatprep.mubr.f32.mxu0 0.0
  %307 = vmatmul.mubr.f32.gmra.mxu0 %v30
  %v308 = vpop.f32.mrf.mxu0
  %v309 = vadd.f32 %v114, %v308
  %v310 = vpop.f32.mrf.mxu0
  %v311 = vadd.f32 %v118, %v310
  %312 = vmatprep.mubr.f32.mxu0 0.0
  %313 = vmatmul.mubr.f32.gmra.mxu0 %v31
  %v314 = vpop.f32.mrf.mxu0
  %v315 = vadd.f32 %v114, %v314
  %v316 = vpop.f32.mrf.mxu0
  %v317 = vadd.f32 %v118, %v316
  %318 = vmatprep.mubr.f32.mxu0 0.0
  %319 = vmatmul.mubr.f32.gmra.mxu0 %v32
  %v320 = vpop.f32.mrf.mxu0
  %v321 = vadd.f32 %v114, %v320
  %v322 = vpop.f32.mrf.mxu0
  %v323 = vadd.f32 %v118, %v322
  %324 = vmatprep.mubr.f32.mxu0 0.0
  %325 = vmatmul.mubr.f32.gmra.mxu0 %v33
  %v326 = vpop.f32.mrf.mxu0
  %v327 = vadd.f32 %v114, %v326
  %v328 = vpop.f32.mrf.mxu0
  %v329 = vadd.f32 %v118, %v328
  %330 = vmatprep.mubr.f32.mxu0 0.0
  %331 = vmatmul.mubr.f32.gmra.mxu0 %v34
  %v332 = vpop.f32.mrf.mxu0
  %v333 = vadd.f32 %v114, %v332
  %v334 = vpop.f32.mrf.mxu0
  %v335 = vadd.f32 %v118, %v334
  %336 = vmatprep.mubr.f32.mxu0 0.0
  %337 = vmatmul.mubr.f32.gmra.mxu0 %v35
  %v338 = vpop.f32.mrf.mxu0
  %v339 = vadd.f32 %v114, %v338
  %v340 = vpop.f32.mrf.mxu0
  %v341 = vadd.f32 %v118, %v340
  %342 = vmatprep.mubr.f32.mxu0 0.0
  %343 = vmatmul.mubr.f32.gmra.mxu0 %v36
  %v344 = vpop.f32.mrf.mxu0
  %v345 = vadd.f32 %v114, %v344
  %v346 = vpop.f32.mrf.mxu0
  %v347 = vadd.f32 %v118, %v346
  %348 = vdwg.mxu0
  %349 = vst [vmem:[#allocation2] sm:$0xff] %v190
  %350 = vst [vmem:[#allocation2 + $0x8] sm:$0xff] %v192
  %351 = vst [vmem:[#allocation2 + $0x10] sm:$0xff] %v303
  %352 = vst [vmem:[#allocation2 + $0x18] sm:$0xff] %v305
  %353 = vst [vmem:[#allocation2 + $0x20] sm:$0xff] %v196
  %354 = vst [vmem:[#allocation2 + $0x28] sm:$0xff] %v198
  %355 = vst [vmem:[#allocation2 + $0x30] sm:$0xff] %v309
  %356 = vst [vmem:[#allocation2 + $0x38] sm:$0xff] %v311
  %357 = vst [vmem:[#allocation2 + $0x40] sm:$0xff] %v202
  %358 = vst [vmem:[#allocation2 + $0x48] sm:$0xff] %v204
  %359 = vst [vmem:[#allocation2 + $0x50] sm:$0xff] %v315
  %360 = vst [vmem:[#allocation2 + $0x58] sm:$0xff] %v317
  %361 = vst [vmem:[#allocation2 + $0x60] sm:$0xff] %v208
  %362 = vst [vmem:[#allocation2 + $0x68] sm:$0xff] %v210
  %363 = vst [vmem:[#allocation2 + $0x70] sm:$0xff] %v321
  %364 = vst [vmem:[#allocation2 + $0x78] sm:$0xff] %v323
  %365 = vst [vmem:[#allocation2 + $0x80] sm:$0xff] %v214
  %366 = vst [vmem:[#allocation2 + $0x88] sm:$0xff] %v216
  %367 = vst [vmem:[#allocation2 + $0x90] sm:$0xff] %v327
  %368 = vst [vmem:[#allocation2 + $0x98] sm:$0xff] %v329
  %369 = vst [vmem:[#allocation2 + $0xa0] sm:$0xff] %v220
  %370 = vst [vmem:[#allocation2 + $0xa8] sm:$0xff] %v222
  %371 = vst [vmem:[#allocation2 + $0xb0] sm:$0xff] %v333
  %372 = vst [vmem:[#allocation2 + $0xb8] sm:$0xff] %v335
  %373 = vst [vmem:[#allocation2 + $0xc0] sm:$0xff] %v226
  %374 = vst [vmem:[#allocation2 + $0xc8] sm:$0xff] %v228
  %375 = vst [vmem:[#allocation2 + $0xd0] sm:$0xff] %v339
  %376 = vst [vmem:[#allocation2 + $0xd8] sm:$0xff] %v341
  %377 = vst [vmem:[#allocation2 + $0xe0] sm:$0xff] %v232
  %378 = vst [vmem:[#allocation2 + $0xe8] sm:$0xff] %v234
  %379 = vst [vmem:[#allocation2 + $0xf0] sm:$0xff] %v345
  %380 = vst [vmem:[#allocation2 + $0xf8] sm:$0xff] %v347
  %v381 = vld [vmem:[#allocation3] sm:$0xff]
  %v382 = vld [vmem:[#allocation4] sm:$0xff]
  %s383 = smul.u32 0, 4
  %s384 = smul.addr %s383, 8
  %s385 = scalar_lea.vmem [#allocation2], %s384
  %v386 = vld [vmem:[%s385] sm:$0xff]
  %v387 = vld [vmem:[%s385 + $0x8] sm:$0xff]
  %v388 = vld [vmem:[%s385 + $0x10] sm:$0xff]
  %v389 = vld [vmem:[%s385 + $0x18] sm:$0xff]
  %v390 = vld [vmem:[%s2] sm:$0xff]
  %v391 = vld [vmem:[%s2 + $0x8] sm:$0xff]
  %v392 = vld [vmem:[%s2 + $0x10] sm:$0xff]
  %v393 = vld [vmem:[%s2 + $0x18] sm:$0xff]
  %v394 = vld [vmem:[%s2 + $0x20] sm:$0xff]
  %v395 = vld [vmem:[%s2 + $0x28] sm:$0xff]
  %v396 = vld [vmem:[%s2 + $0x30] sm:$0xff]
  %v397 = vld [vmem:[%s2 + $0x38] sm:$0xff]
  %v398 = vld [vmem:[%s2 + $0x40] sm:$0xff]
  %v399 = vld [vmem:[%s2 + $0x48] sm:$0xff]
  %v400 = vld [vmem:[%s2 + $0x50] sm:$0xff]
  %v401 = vld [vmem:[%s2 + $0x58] sm:$0xff]
  %v402 = vld [vmem:[%s2 + $0x60] sm:$0xff]
  %v403 = vld [vmem:[%s2 + $0x68] sm:$0xff]
  %v404 = vld [vmem:[%s2 + $0x70] sm:$0xff]
  %v405 = vld [vmem:[%s2 + $0x78] sm:$0xff]
  %v406 = vld [vmem:[%s2 + $0x80] sm:$0xff]
  %v407 = vld [vmem:[%s2 + $0x88] sm:$0xff]
  %v408 = vld [vmem:[%s2 + $0x90] sm:$0xff]
  %v409 = vld [vmem:[%s2 + $0x98] sm:$0xff]
  %v410 = vld [vmem:[%s2 + $0xa0] sm:$0xff]
  %v411 = vld [vmem:[%s2 + $0xa8] sm:$0xff]
  %v412 = vld [vmem:[%s2 + $0xb0] sm:$0xff]
  %v413 = vld [vmem:[%s2 + $0xb8] sm:$0xff]
  %v414 = vld [vmem:[%s2 + $0xc0] sm:$0xff]
  %v415 = vld [vmem:[%s2 + $0xc8] sm:$0xff]
  %v416 = vld [vmem:[%s2 + $0xd0] sm:$0xff]
  %v417 = vld [vmem:[%s2 + $0xd8] sm:$0xff]
  %v418 = vld [vmem:[%s2 + $0xe0] sm:$0xff]
  %v419 = vld [vmem:[%s2 + $0xe8] sm:$0xff]
  %v420 = vld [vmem:[%s2 + $0xf0] sm:$0xff]
  %v421 = vld [vmem:[%s2 + $0xf8] sm:$0xff]
  %v422 = vld [vmem:[%s2 + $0x100] sm:$0xff]
  %v423 = vld [vmem:[%s2 + $0x108] sm:$0xff]
  %v424 = vld [vmem:[%s2 + $0x110] sm:$0xff]
  %v425 = vld [vmem:[%s2 + $0x118] sm:$0xff]
  %v426 = vld [vmem:[%s2 + $0x120] sm:$0xff]
  %v427 = vld [vmem:[%s2 + $0x128] sm:$0xff]
  %v428 = vld [vmem:[%s2 + $0x130] sm:$0xff]
  %v429 = vld [vmem:[%s2 + $0x138] sm:$0xff]
  %v430 = vld [vmem:[%s2 + $0x140] sm:$0xff]
  %v431 = vld [vmem:[%s2 + $0x148] sm:$0xff]
  %v432 = vld [vmem:[%s2 + $0x150] sm:$0xff]
  %v433 = vld [vmem:[%s2 + $0x158] sm:$0xff]
  %v434 = vld [vmem:[%s2 + $0x160] sm:$0xff]
  %v435 = vld [vmem:[%s2 + $0x168] sm:$0xff]
  %v436 = vld [vmem:[%s2 + $0x170] sm:$0xff]
  %v437 = vld [vmem:[%s2 + $0x178] sm:$0xff]
  %v438 = vld [vmem:[%s2 + $0x180] sm:$0xff]
  %v439 = vld [vmem:[%s2 + $0x188] sm:$0xff]
  %v440 = vld [vmem:[%s2 + $0x190] sm:$0xff]
  %v441 = vld [vmem:[%s2 + $0x198] sm:$0xff]
  %v442 = vld [vmem:[%s2 + $0x1a0] sm:$0xff]
  %v443 = vld [vmem:[%s2 + $0x1a8] sm:$0xff]
  %v444 = vld [vmem:[%s2 + $0x1b0] sm:$0xff]
  %v445 = vld [vmem:[%s2 + $0x1b8] sm:$0xff]
  %v446 = vld [vmem:[%s2 + $0x1c0] sm:$0xff]
  %v447 = vld [vmem:[%s2 + $0x1c8] sm:$0xff]
  %v448 = vld [vmem:[%s2 + $0x1d0] sm:$0xff]
  %v449 = vld [vmem:[%s2 + $0x1d8] sm:$0xff]
  %v450 = vld [vmem:[%s2 + $0x1e0] sm:$0xff]
  %v451 = vld [vmem:[%s2 + $0x1e8] sm:$0xff]
  %v452 = vld [vmem:[%s2 + $0x1f0] sm:$0xff]
  %v453 = vld [vmem:[%s2 + $0x1f8] sm:$0xff]
  %454 = vmatprep.subr.mxu0 %v451
  %455 = vmatpush1.msra.mxu0 %v450
  %456 = vmatprep.subr.mxu0 %v447
  %457 = vmatpush1.msra.mxu0 %v446
  %458 = vmatprep.subr.mxu0 %v443
  %459 = vmatpush1.msra.mxu0 %v442
  %460 = vmatprep.subr.mxu0 %v439
  %461 = vmatpush1.msra.mxu0 %v438
  %462 = vmatprep.subr.mxu0 %v435
  %463 = vmatpush1.msra.mxu0 %v434
  %464 = vmatprep.subr.mxu0 %v431
  %465 = vmatpush1.msra.mxu0 %v430
  %466 = vmatprep.subr.mxu0 %v427
  %467 = vmatpush1.msra.mxu0 %v426
  %468 = vmatprep.subr.mxu0 %v423
  %469 = vmatpush1.msra.mxu0 %v422
  %470 = vmatprep.subr.mxu0 %v419
  %471 = vmatpush1.msra.mxu0 %v418
  %472 = vmatprep.subr.mxu0 %v415
  %473 = vmatpush1.msra.mxu0 %v414
  %474 = vmatprep.subr.mxu0 %v411
  %475 = vmatpush1.msra.mxu0 %v410
  %476 = vmatprep.subr.mxu0 %v407
  %477 = vmatpush1.msra.mxu0 %v406
  %478 = vmatprep.subr.mxu0 %v403
  %479 = vmatpush1.msra.mxu0 %v402
  %480 = vmatprep.subr.mxu0 %v399
  %481 = vmatpush1.msra.mxu0 %v398
  %482 = vmatprep.subr.mxu0 %v395
  %483 = vmatpush1.msra.mxu0 %v394
  %484 = vmatprep.subr.mxu0 %v391
  %485 = vmatpush1.msra.mxu0 %v390
  %486 = vmatprep.subr.mxu0 0.0
  %487 = vmatpush2.msra.mxu0 0.0
  %488 = vmatprep.subr.mxu0 0.0
  %489 = vmatpush2.msra.mxu0 0.0
  %490 = vmatprep.subr.mxu0 0.0
  %491 = vmatpush2.msra.mxu0 0.0
  %492 = vmatprep.subr.mxu0 0.0
  %493 = vmatpush2.msra.mxu0 0.0
  %494 = vmatprep.subr.mxu0 0.0
  %495 = vmatpush2.msra.mxu0 0.0
  %496 = vmatprep.subr.mxu0 0.0
  %497 = vmatpush2.msra.mxu0 0.0
  %498 = vmatprep.subr.mxu0 0.0
  %499 = vmatpush2.msra.mxu0 0.0
  %500 = vmatprep.subr.mxu0 0.0
  %501 = vmatpush2.msra.mxu0 0.0
  %502 = vmatprep.subr.mxu0 0.0
  %503 = vmatpush2.msra.mxu0 0.0
  %504 = vmatprep.subr.mxu0 0.0
  %505 = vmatpush2.msra.mxu0 0.0
  %506 = vmatprep.subr.mxu0 0.0
  %507 = vmatpush2.msra.mxu0 0.0
  %508 = vmatprep.subr.mxu0 0.0
  %509 = vmatpush2.msra.mxu0 0.0
  %510 = vmatprep.subr.mxu0 0.0
  %511 = vmatpush2.msra.mxu0 0.0
  %512 = vmatprep.subr.mxu0 0.0
  %513 = vmatpush2.msra.mxu0 0.0
  %514 = vmatprep.subr.mxu0 0.0
  %515 = vmatpush2.msra.mxu0 0.0
  %516 = vmatprep.subr.mxu0 0.0
  %517 = vmatpush2.msra.mxu0 0.0
  %518 = vmatprep.mubr.f32.mxu0 0.0
  %519 = vmatmul.mubr.f32.gmra.mxu0 %v381
  %v520 = vpop.f32.mrf.mxu0
  %v521 = vadd.f32 0.0, %v520
  %v522 = vpop.f32.mrf.mxu0
  %v523 = vadd.f32 0.0, %v522
  %524 = vdwg.mxu0
  %525 = vmatprep.subr.mxu0 %v453
  %526 = vmatpush1.msra.mxu0 %v452
  %527 = vmatprep.subr.mxu0 %v449
  %528 = vmatpush1.msra.mxu0 %v448
  %529 = vmatprep.subr.mxu0 %v445
  %530 = vmatpush1.msra.mxu0 %v444
  %531 = vmatprep.subr.mxu0 %v441
  %532 = vmatpush1.msra.mxu0 %v440
  %533 = vmatprep.subr.mxu0 %v437
  %534 = vmatpush1.msra.mxu0 %v436
  %535 = vmatprep.subr.mxu0 %v433
  %536 = vmatpush1.msra.mxu0 %v432
  %537 = vmatprep.subr.mxu0 %v429
  %538 = vmatpush1.msra.mxu0 %v428
  %539 = vmatprep.subr.mxu0 %v425
  %540 = vmatpush1.msra.mxu0 %v424
  %541 = vmatprep.subr.mxu0 %v421
  %542 = vmatpush1.msra.mxu0 %v420
  %543 = vmatprep.subr.mxu0 %v417
  %544 = vmatpush1.msra.mxu0 %v416
  %545 = vmatprep.subr.mxu0 %v413
  %546 = vmatpush1.msra.mxu0 %v412
  %547 = vmatprep.subr.mxu0 %v409
  %548 = vmatpush1.msra.mxu0 %v408
  %549 = vmatprep.subr.mxu0 %v405
  %550 = vmatpush1.msra.mxu0 %v404
  %551 = vmatprep.subr.mxu0 %v401
  %552 = vmatpush1.msra.mxu0 %v400
  %553 = vmatprep.subr.mxu0 %v397
  %554 = vmatpush1.msra.mxu0 %v396
  %555 = vmatprep.subr.mxu0 %v393
  %556 = vmatpush1.msra.mxu0 %v392
  %557 = vmatprep.subr.mxu0 0.0
  %558 = vmatpush2.msra.mxu0 0.0
  %559 = vmatprep.subr.mxu0 0.0
  %560 = vmatpush2.msra.mxu0 0.0
  %561 = vmatprep.subr.mxu0 0.0
  %562 = vmatpush2.msra.mxu0 0.0
  %563 = vmatprep.subr.mxu0 0.0
  %564 = vmatpush2.msra.mxu0 0.0
  %565 = vmatprep.subr.mxu0 0.0
  %566 = vmatpush2.msra.mxu0 0.0
  %567 = vmatprep.subr.mxu0 0.0
  %568 = vmatpush2.msra.mxu0 0.0
  %569 = vmatprep.subr.mxu0 0.0
  %570 = vmatpush2.msra.mxu0 0.0
  %571 = vmatprep.subr.mxu0 0.0
  %572 = vmatpush2.msra.mxu0 0.0
  %573 = vmatprep.subr.mxu0 0.0
  %574 = vmatpush2.msra.mxu0 0.0
  %575 = vmatprep.subr.mxu0 0.0
  %576 = vmatpush2.msra.mxu0 0.0
  %577 = vmatprep.subr.mxu0 0.0
  %578 = vmatpush2.msra.mxu0 0.0
  %579 = vmatprep.subr.mxu0 0.0
  %580 = vmatpush2.msra.mxu0 0.0
  %581 = vmatprep.subr.mxu0 0.0
  %582 = vmatpush2.msra.mxu0 0.0
  %583 = vmatprep.subr.mxu0 0.0
  %584 = vmatpush2.msra.mxu0 0.0
  %585 = vmatprep.subr.mxu0 0.0
  %586 = vmatpush2.msra.mxu0 0.0
  %587 = vmatprep.subr.mxu0 0.0
  %588 = vmatpush2.msra.mxu0 0.0
  %589 = vmatprep.mubr.f32.mxu0 0.0
  %590 = vmatmul.mubr.f32.gmra.mxu0 %v381
  %v591 = vpop.f32.mrf.mxu0
  %v592 = vadd.f32 0.0, %v591
  %v593 = vpop.f32.mrf.mxu0
  %v594 = vadd.f32 0.0, %v593
  %595 = vdwg.mxu0
  %v596 = vadd.f32 %v386, %v521
  %v597 = vadd.f32 %v387, %v523
  %v598 = vadd.f32 %v388, %v592
  %v599 = vadd.f32 %v389, %v594
  %v600 = vmul.f32 %v596, 0.5
  %v601 = vtanh.pop %v600
  %v602 = vmul.f32 %v601, 0.5
  %v603 = vadd.f32 %v602, 0.5
  %v604 = vmul.f32 %v597, 0.5
  %v605 = vtanh.pop %v604
  %v606 = vmul.f32 %v605, 0.5
  %v607 = vadd.f32 %v606, 0.5
  %v608 = vtanh.pop %v598
  %v609 = vmul.f32 %v599, 0.5
  %v610 = vtanh.pop %v609
  %v611 = vmul.f32 %v610, 0.5
  %v612 = vadd.f32 %v611, 0.5
  %v613 = vmul.f32 %v607, %v382
  %v614 = vmul.f32 %v603, %v608
  %v615 = vadd.f32 %v613, %v614
  %v616 = vtanh.pop %v615
  %v617 = vmul.f32 %v612, %v616
  %s618 = smul.u32 1, 4
  %s619 = smul.addr %s618, 8
  %s620 = scalar_lea.vmem [#allocation2], %s619
  %v621 = vld [vmem:[%s620] sm:$0xff]
  %v622 = vld [vmem:[%s620 + $0x8] sm:$0xff]
  %v623 = vld [vmem:[%s620 + $0x10] sm:$0xff]
  %v624 = vld [vmem:[%s620 + $0x18] sm:$0xff]
  %625 = vmatprep.subr.mxu0 %v451
  %626 = vmatpush1.msra.mxu0 %v450
  %627 = vmatprep.subr.mxu0 %v447
  %628 = vmatpush1.msra.mxu0 %v446
  %629 = vmatprep.subr.mxu0 %v443
  %630 = vmatpush1.msra.mxu0 %v442
  %631 = vmatprep.subr.mxu0 %v439
  %632 = vmatpush1.msra.mxu0 %v438
  %633 = vmatprep.subr.mxu0 %v435
  %634 = vmatpush1.msra.mxu0 %v434
  %635 = vmatprep.subr.mxu0 %v431
  %636 = vmatpush1.msra.mxu0 %v430
  %637 = vmatprep.subr.mxu0 %v427
  %638 = vmatpush1.msra.mxu0 %v426
  %639 = vmatprep.subr.mxu0 %v423
  %640 = vmatpush1.msra.mxu0 %v422
  %641 = vmatprep.subr.mxu0 %v419
  %642 = vmatpush1.msra.mxu0 %v418
  %643 = vmatprep.subr.mxu0 %v415
  %644 = vmatpush1.msra.mxu0 %v414
  %645 = vmatprep.subr.mxu0 %v411
  %646 = vmatpush1.msra.mxu0 %v410
  %647 = vmatprep.subr.mxu0 %v407
  %648 = vmatpush1.msra.mxu0 %v406
  %649 = vmatprep.subr.mxu0 %v403
  %650 = vmatpush1.msra.mxu0 %v402
  %651 = vmatprep.subr.mxu0 %v399
  %652 = vmatpush1.msra.mxu0 %v398
  %653 = vmatprep.subr.mxu0 %v395
  %654 = vmatpush1.msra.mxu0 %v394
  %655 = vmatprep.subr.mxu0 %v391
  %656 = vmatpush1.msra.mxu0 %v390
  %657 = vmatprep.subr.mxu0 0.0
  %658 = vmatpush2.msra.mxu0 0.0
  %659 = vmatprep.subr.mxu0 0.0
  %660 = vmatpush2.msra.mxu0 0.0
  %661 = vmatprep.subr.mxu0 0.0
  %662 = vmatpush2.msra.mxu0 0.0
  %663 = vmatprep.subr.mxu0 0.0
  %664 = vmatpush2.msra.mxu0 0.0
  %665 = vmatprep.subr.mxu0 0.0
  %666 = vmatpush2.msra.mxu0 0.0
  %667 = vmatprep.subr.mxu0 0.0
  %668 = vmatpush2.msra.mxu0 0.0
  %669 = vmatprep.subr.mxu0 0.0
  %670 = vmatpush2.msra.mxu0 0.0
  %671 = vmatprep.subr.mxu0 0.0
  %672 = vmatpush2.msra.mxu0 0.0
  %673 = vmatprep.subr.mxu0 0.0
  %674 = vmatpush2.msra.mxu0 0.0
  %675 = vmatprep.subr.mxu0 0.0
  %676 = vmatpush2.msra.mxu0 0.0
  %677 = vmatprep.subr.mxu0 0.0
  %678 = vmatpush2.msra.mxu0 0.0
  %679 = vmatprep.subr.mxu0 0.0
  %680 = vmatpush2.msra.mxu0 0.0
  %681 = vmatprep.subr.mxu0 0.0
  %682 = vmatpush2.msra.mxu0 0.0
  %683 = vmatprep.subr.mxu0 0.0
  %684 = vmatpush2.msra.mxu0 0.0
  %685 = vmatprep.subr.mxu0 0.0
  %686 = vmatpush2.msra.mxu0 0.0
  %687 = vmatprep.subr.mxu0 0.0
  %688 = vmatpush2.msra.mxu0 0.0
  %689 = vmatprep.mubr.f32.mxu0 0.0
  %690 = vmatmul.mubr.f32.gmra.mxu0 %v617
  %v691 = vpop.f32.mrf.mxu0
  %v692 = vadd.f32 0.0, %v691
  %v693 = vpop.f32.mrf.mxu0
  %v694 = vadd.f32 0.0, %v693
  %695 = vdwg.mxu0
  %696 = vmatprep.subr.mxu0 %v453
  %697 = vmatpush1.msra.mxu0 %v452
  %698 = vmatprep.subr.mxu0 %v449
  %699 = vmatpush1.msra.mxu0 %v448
  %700 = vmatprep.subr.mxu0 %v445
  %701 = vmatpush1.msra.mxu0 %v444
  %702 = vmatprep.subr.mxu0 %v441
  %703 = vmatpush1.msra.mxu0 %v440
  %704 = vmatprep.subr.mxu0 %v437
  %705 = vmatpush1.msra.mxu0 %v436
  %706 = vmatprep.subr.mxu0 %v433
  %707 = vmatpush1.msra.mxu0 %v432
  %708 = vmatprep.subr.mxu0 %v429
  %709 = vmatpush1.msra.mxu0 %v428
  %710 = vmatprep.subr.mxu0 %v425
  %711 = vmatpush1.msra.mxu0 %v424
  %712 = vmatprep.subr.mxu0 %v421
  %713 = vmatpush1.msra.mxu0 %v420
  %714 = vmatprep.subr.mxu0 %v417
  %715 = vmatpush1.msra.mxu0 %v416
  %716 = vmatprep.subr.mxu0 %v413
  %717 = vmatpush1.msra.mxu0 %v412
  %718 = vmatprep.subr.mxu0 %v409
  %719 = vmatpush1.msra.mxu0 %v408
  %720 = vmatprep.subr.mxu0 %v405
  %721 = vmatpush1.msra.mxu0 %v404
  %722 = vmatprep.subr.mxu0 %v401
  %723 = vmatpush1.msra.mxu0 %v400
  %724 = vmatprep.subr.mxu0 %v397
  %725 = vmatpush1.msra.mxu0 %v396
  %726 = vmatprep.subr.mxu0 %v393
  %727 = vmatpush1.msra.mxu0 %v392
  %728 = vmatprep.subr.mxu0 0.0
  %729 = vmatpush2.msra.mxu0 0.0
  %730 = vmatprep.subr.mxu0 0.0
  %731 = vmatpush2.msra.mxu0 0.0
  %732 = vmatprep.subr.mxu0 0.0
  %733 = vmatpush2.msra.mxu0 0.0
  %734 = vmatprep.subr.mxu0 0.0
  %735 = vmatpush2.msra.mxu0 0.0
  %736 = vmatprep.subr.mxu0 0.0
  %737 = vmatpush2.msra.mxu0 0.0
  %738 = vmatprep.subr.mxu0 0.0
  %739 = vmatpush2.msra.mxu0 0.0
  %740 = vmatprep.subr.mxu0 0.0
  %741 = vmatpush2.msra.mxu0 0.0
  %742 = vmatprep.subr.mxu0 0.0
  %743 = vmatpush2.msra.mxu0 0.0
  %744 = vmatprep.subr.mxu0 0.0
  %745 = vmatpush2.msra.mxu0 0.0
  %746 = vmatprep.subr.mxu0 0.0
  %747 = vmatpush2.msra.mxu0 0.0
  %748 = vmatprep.subr.mxu0 0.0
  %749 = vmatpush2.msra.mxu0 0.0
  %750 = vmatprep.subr.mxu0 0.0
  %751 = vmatpush2.msra.mxu0 0.0
  %752 = vmatprep.subr.mxu0 0.0
  %753 = vmatpush2.msra.mxu0 0.0
  %754 = vmatprep.subr.mxu0 0.0
  %755 = vmatpush2.msra.mxu0 0.0
  %756 = vmatprep.subr.mxu0 0.0
  %757 = vmatpush2.msra.mxu0 0.0
  %758 = vmatprep.subr.mxu0 0.0
  %759 = vmatpush2.msra.mxu0 0.0
  %760 = vmatprep.mubr.f32.mxu0 0.0
  %761 = vmatmul.mubr.f32.gmra.mxu0 %v617
  %v762 = vpop.f32.mrf.mxu0
  %v763 = vadd.f32 0.0, %v762
  %v764 = vpop.f32.mrf.mxu0
  %v765 = vadd.f32 0.0, %v764
  %766 = vdwg.mxu0
  %v767 = vadd.f32 %v621, %v692
  %v768 = vadd.f32 %v622, %v694
  %v769 = vadd.f32 %v623, %v763
  %v770 = vadd.f32 %v624, %v765
  %v771 = vmul.f32 %v767, 0.5
  %v772 = vtanh.pop %v771
  %v773 = vmul.f32 %v772, 0.5
  %v774 = vadd.f32 %v773, 0.5
  %v775 = vmul.f32 %v768, 0.5
  %v776 = vtanh.pop %v775
  %v777 = vmul.f32 %v776, 0.5
  %v778 = vadd.f32 %v777, 0.5
  %v779 = vtanh.pop %v769
  %v780 = vmul.f32 %v770, 0.5
  %v781 = vtanh.pop %v780
  %v782 = vmul.f32 %v781, 0.5
  %v783 = vadd.f32 %v782, 0.5
  %v784 = vmul.f32 %v778, %v615
  %v785 = vmul.f32 %v774, %v779
  %v786 = vadd.f32 %v784, %v785
  %v787 = vtanh.pop %v786
  %v788 = vmul.f32 %v783, %v787
  %s789 = smul.u32 2, 4
  %s790 = smul.addr %s789, 8
  %s791 = scalar_lea.vmem [#allocation2], %s790
  %v792 = vld [vmem:[%s791] sm:$0xff]
  %v793 = vld [vmem:[%s791 + $0x8] sm:$0xff]
  %v794 = vld [vmem:[%s791 + $0x10] sm:$0xff]
  %v795 = vld [vmem:[%s791 + $0x18] sm:$0xff]
  %796 = vmatprep.subr.mxu0 %v451
  %797 = vmatpush1.msra.mxu0 %v450
  %798 = vmatprep.subr.mxu0 %v447
  %799 = vmatpush1.msra.mxu0 %v446
  %800 = vmatprep.subr.mxu0 %v443
  %801 = vmatpush1.msra.mxu0 %v442
  %802 = vmatprep.subr.mxu0 %v439
  %803 = vmatpush1.msra.mxu0 %v438
  %804 = vmatprep.subr.mxu0 %v435
  %805 = vmatpush1.msra.mxu0 %v434
  %806 = vmatprep.subr.mxu0 %v431
  %807 = vmatpush1.msra.mxu0 %v430
  %808 = vmatprep.subr.mxu0 %v427
  %809 = vmatpush1.msra.mxu0 %v426
  %810 = vmatprep.subr.mxu0 %v423
  %811 = vmatpush1.msra.mxu0 %v422
  %812 = vmatprep.subr.mxu0 %v419
  %813 = vmatpush1.msra.mxu0 %v418
  %814 = vmatprep.subr.mxu0 %v415
  %815 = vmatpush1.msra.mxu0 %v414
  %816 = vmatprep.subr.mxu0 %v411
  %817 = vmatpush1.msra.mxu0 %v410
  %818 = vmatprep.subr.mxu0 %v407
  %819 = vmatpush1.msra.mxu0 %v406
  %820 = vmatprep.subr.mxu0 %v403
  %821 = vmatpush1.msra.mxu0 %v402
  %822 = vmatprep.subr.mxu0 %v399
  %823 = vmatpush1.msra.mxu0 %v398
  %824 = vmatprep.subr.mxu0 %v395
  %825 = vmatpush1.msra.mxu0 %v394
  %826 = vmatprep.subr.mxu0 %v391
  %827 = vmatpush1.msra.mxu0 %v390
  %828 = vmatprep.subr.mxu0 0.0
  %829 = vmatpush2.msra.mxu0 0.0
  %830 = vmatprep.subr.mxu0 0.0
  %831 = vmatpush2.msra.mxu0 0.0
  %832 = vmatprep.subr.mxu0 0.0
  %833 = vmatpush2.msra.mxu0 0.0
  %834 = vmatprep.subr.mxu0 0.0
  %835 = vmatpush2.msra.mxu0 0.0
  %836 = vmatprep.subr.mxu0 0.0
  %837 = vmatpush2.msra.mxu0 0.0
  %838 = vmatprep.subr.mxu0 0.0
  %839 = vmatpush2.msra.mxu0 0.0
  %840 = vmatprep.subr.mxu0 0.0
  %841 = vmatpush2.msra.mxu0 0.0
  %842 = vmatprep.subr.mxu0 0.0
  %843 = vmatpush2.msra.mxu0 0.0
  %844 = vmatprep.subr.mxu0 0.0
  %845 = vmatpush2.msra.mxu0 0.0
  %846 = vmatprep.subr.mxu0 0.0
  %847 = vmatpush2.msra.mxu0 0.0
  %848 = vmatprep.subr.mxu0 0.0
  %849 = vmatpush2.msra.mxu0 0.0
  %850 = vmatprep.subr.mxu0 0.0
  %851 = vmatpush2.msra.mxu0 0.0
  %852 = vmatprep.subr.mxu0 0.0
  %853 = vmatpush2.msra.mxu0 0.0
  %854 = vmatprep.subr.mxu0 0.0
  %855 = vmatpush2.msra.mxu0 0.0
  %856 = vmatprep.subr.mxu0 0.0
  %857 = vmatpush2.msra.mxu0 0.0
  %858 = vmatprep.subr.mxu0 0.0
  %859 = vmatpush2.msra.mxu0 0.0
  %860 = vmatprep.mubr.f32.mxu0 0.0
  %861 = vmatmul.mubr.f32.gmra.mxu0 %v788
  %v862 = vpop.f32.mrf.mxu0
  %v863 = vadd.f32 0.0, %v862
  %v864 = vpop.f32.mrf.mxu0
  %v865 = vadd.f32 0.0, %v864
  %866 = vdwg.mxu0
  %867 = vmatprep.subr.mxu0 %v453
  %868 = vmatpush1.msra.mxu0 %v452
  %869 = vmatprep.subr.mxu0 %v449
  %870 = vmatpush1.msra.mxu0 %v448
  %871 = vmatprep.subr.mxu0 %v445
  %872 = vmatpush1.msra.mxu0 %v444
  %873 = vmatprep.subr.mxu0 %v441
  %874 = vmatpush1.msra.mxu0 %v440
  %875 = vmatprep.subr.mxu0 %v437
  %876 = vmatpush1.msra.mxu0 %v436
  %877 = vmatprep.subr.mxu0 %v433
  %878 = vmatpush1.msra.mxu0 %v432
  %879 = vmatprep.subr.mxu0 %v429
  %880 = vmatpush1.msra.mxu0 %v428
  %881 = vmatprep.subr.mxu0 %v425
  %882 = vmatpush1.msra.mxu0 %v424
  %883 = vmatprep.subr.mxu0 %v421
  %884 = vmatpush1.msra.mxu0 %v420
  %885 = vmatprep.subr.mxu0 %v417
  %886 = vmatpush1.msra.mxu0 %v416
  %887 = vmatprep.subr.mxu0 %v413
  %888 = vmatpush1.msra.mxu0 %v412
  %889 = vmatprep.subr.mxu0 %v409
  %890 = vmatpush1.msra.mxu0 %v408
  %891 = vmatprep.subr.mxu0 %v405
  %892 = vmatpush1.msra.mxu0 %v404
  %893 = vmatprep.subr.mxu0 %v401
  %894 = vmatpush1.msra.mxu0 %v400
  %895 = vmatprep.subr.mxu0 %v397
  %896 = vmatpush1.msra.mxu0 %v396
  %897 = vmatprep.subr.mxu0 %v393
  %898 = vmatpush1.msra.mxu0 %v392
  %899 = vmatprep.subr.mxu0 0.0
  %900 = vmatpush2.msra.mxu0 0.0
  %901 = vmatprep.subr.mxu0 0.0
  %902 = vmatpush2.msra.mxu0 0.0
  %903 = vmatprep.subr.mxu0 0.0
  %904 = vmatpush2.msra.mxu0 0.0
  %905 = vmatprep.subr.mxu0 0.0
  %906 = vmatpush2.msra.mxu0 0.0
  %907 = vmatprep.subr.mxu0 0.0
  %908 = vmatpush2.msra.mxu0 0.0
  %909 = vmatprep.subr.mxu0 0.0
  %910 = vmatpush2.msra.mxu0 0.0
  %911 = vmatprep.subr.mxu0 0.0
  %912 = vmatpush2.msra.mxu0 0.0
  %913 = vmatprep.subr.mxu0 0.0
  %914 = vmatpush2.msra.mxu0 0.0
  %915 = vmatprep.subr.mxu0 0.0
  %916 = vmatpush2.msra.mxu0 0.0
  %917 = vmatprep.subr.mxu0 0.0
  %918 = vmatpush2.msra.mxu0 0.0
  %919 = vmatprep.subr.mxu0 0.0
  %920 = vmatpush2.msra.mxu0 0.0
  %921 = vmatprep.subr.mxu0 0.0
  %922 = vmatpush2.msra.mxu0 0.0
  %923 = vmatprep.subr.mxu0 0.0
  %924 = vmatpush2.msra.mxu0 0.0
  %925 = vmatprep.subr.mxu0 0.0
  %926 = vmatpush2.msra.mxu0 0.0
  %927 = vmatprep.subr.mxu0 0.0
  %928 = vmatpush2.msra.mxu0 0.0
  %929 = vmatprep.subr.mxu0 0.0
  %930 = vmatpush2.msra.mxu0 0.0
  %931 = vmatprep.mubr.f32.mxu0 0.0
  %932 = vmatmul.mubr.f32.gmra.mxu0 %v788
  %v933 = vpop.f32.mrf.mxu0
  %v934 = vadd.f32 0.0, %v933
  %v935 = vpop.f32.mrf.mxu0
  %v936 = vadd.f32 0.0, %v935
  %937 = vdwg.mxu0
  %v938 = vadd.f32 %v792, %v863
  %v939 = vadd.f32 %v793, %v865
  %v940 = vadd.f32 %v794, %v934
  %v941 = vadd.f32 %v795, %v936
  %v942 = vmul.f32 %v938, 0.5
  %v943 = vtanh.pop %v942
  %v944 = vmul.f32 %v943, 0.5
  %v945 = vadd.f32 %v944, 0.5
  %v946 = vmul.f32 %v939, 0.5
  %v947 = vtanh.pop %v946
  %v948 = vmul.f32 %v947, 0.5
  %v949 = vadd.f32 %v948, 0.5
  %v950 = vtanh.pop %v940
  %v951 = vmul.f32 %v941, 0.5
  %v952 = vtanh.pop %v951
  %v953 = vmul.f32 %v952, 0.5
  %v954 = vadd.f32 %v953, 0.5
  %v955 = vmul.f32 %v949, %v786
  %v956 = vmul.f32 %v945, %v950
  %v957 = vadd.f32 %v955, %v956
  %v958 = vtanh.pop %v957
  %v959 = vmul.f32 %v954, %v958
  %s960 = smul.u32 3, 4
  %s961 = smul.addr %s960, 8
  %s962 = scalar_lea.vmem [#allocation2], %s961
  %v963 = vld [vmem:[%s962] sm:$0xff]
  %v964 = vld [vmem:[%s962 + $0x8] sm:$0xff]
  %v965 = vld [vmem:[%s962 + $0x10] sm:$0xff]
  %v966 = vld [vmem:[%s962 + $0x18] sm:$0xff]
  %967 = vmatprep.subr.mxu0 %v451
  %968 = vmatpush1.msra.mxu0 %v450
  %969 = vmatprep.subr.mxu0 %v447
  %970 = vmatpush1.msra.mxu0 %v446
  %971 = vmatprep.subr.mxu0 %v443
  %972 = vmatpush1.msra.mxu0 %v442
  %973 = vmatprep.subr.mxu0 %v439
  %974 = vmatpush1.msra.mxu0 %v438
  %975 = vmatprep.subr.mxu0 %v435
  %976 = vmatpush1.msra.mxu0 %v434
  %977 = vmatprep.subr.mxu0 %v431
  %978 = vmatpush1.msra.mxu0 %v430
  %979 = vmatprep.subr.mxu0 %v427
  %980 = vmatpush1.msra.mxu0 %v426
  %981 = vmatprep.subr.mxu0 %v423
  %982 = vmatpush1.msra.mxu0 %v422
  %983 = vmatprep.subr.mxu0 %v419
  %984 = vmatpush1.msra.mxu0 %v418
  %985 = vmatprep.subr.mxu0 %v415
  %986 = vmatpush1.msra.mxu0 %v414
  %987 = vmatprep.subr.mxu0 %v411
  %988 = vmatpush1.msra.mxu0 %v410
  %989 = vmatprep.subr.mxu0 %v407
  %990 = vmatpush1.msra.mxu0 %v406
  %991 = vmatprep.subr.mxu0 %v403
  %992 = vmatpush1.msra.mxu0 %v402
  %993 = vmatprep.subr.mxu0 %v399
  %994 = vmatpush1.msra.mxu0 %v398
  %995 = vmatprep.subr.mxu0 %v395
  %996 = vmatpush1.msra.mxu0 %v394
  %997 = vmatprep.subr.mxu0 %v391
  %998 = vmatpush1.msra.mxu0 %v390
  %999 = vmatprep.subr.mxu0 0.0
  %1000 = vmatpush2.msra.mxu0 0.0
  %1001 = vmatprep.subr.mxu0 0.0
  %1002 = vmatpush2.msra.mxu0 0.0
  %1003 = vmatprep.subr.mxu0 0.0
  %1004 = vmatpush2.msra.mxu0 0.0
  %1005 = vmatprep.subr.mxu0 0.0
  %1006 = vmatpush2.msra.mxu0 0.0
  %1007 = vmatprep.subr.mxu0 0.0
  %1008 = vmatpush2.msra.mxu0 0.0
  %1009 = vmatprep.subr.mxu0 0.0
  %1010 = vmatpush2.msra.mxu0 0.0
  %1011 = vmatprep.subr.mxu0 0.0
  %1012 = vmatpush2.msra.mxu0 0.0
  %1013 = vmatprep.subr.mxu0 0.0
  %1014 = vmatpush2.msra.mxu0 0.0
  %1015 = vmatprep.subr.mxu0 0.0
  %1016 = vmatpush2.msra.mxu0 0.0
  %1017 = vmatprep.subr.mxu0 0.0
  %1018 = vmatpush2.msra.mxu0 0.0
  %1019 = vmatprep.subr.mxu0 0.0
  %1020 = vmatpush2.msra.mxu0 0.0
  %1021 = vmatprep.subr.mxu0 0.0
  %1022 = vmatpush2.msra.mxu0 0.0
  %1023 = vmatprep.subr.mxu0 0.0
  %1024 = vmatpush2.msra.mxu0 0.0
  %1025 = vmatprep.subr.mxu0 0.0
  %1026 = vmatpush2.msra.mxu0 0.0
  %1027 = vmatprep.subr.mxu0 0.0
  %1028 = vmatpush2.msra.mxu0 0.0
  %1029 = vmatprep.subr.mxu0 0.0
  %1030 = vmatpush2.msra.mxu0 0.0
  %1031 = vmatprep.mubr.f32.mxu0 0.0
  %1032 = vmatmul.mubr.f32.gmra.mxu0 %v959
  %v1033 = vpop.f32.mrf.mxu0
  %v1034 = vadd.f32 0.0, %v1033
  %v1035 = vpop.f32.mrf.mxu0
  %v1036 = vadd.f32 0.0, %v1035
  %1037 = vdwg.mxu0
  %1038 = vmatprep.subr.mxu0 %v453
  %1039 = vmatpush1.msra.mxu0 %v452
  %1040 = vmatprep.subr.mxu0 %v449
  %1041 = vmatpush1.msra.mxu0 %v448
  %1042 = vmatprep.subr.mxu0 %v445
  %1043 = vmatpush1.msra.mxu0 %v444
  %1044 = vmatprep.subr.mxu0 %v441
  %1045 = vmatpush1.msra.mxu0 %v440
  %1046 = vmatprep.subr.mxu0 %v437
  %1047 = vmatpush1.msra.mxu0 %v436
  %1048 = vmatprep.subr.mxu0 %v433
  %1049 = vmatpush1.msra.mxu0 %v432
  %1050 = vmatprep.subr.mxu0 %v429
  %1051 = vmatpush1.msra.mxu0 %v428
  %1052 = vmatprep.subr.mxu0 %v425
  %1053 = vmatpush1.msra.mxu0 %v424
  %1054 = vmatprep.subr.mxu0 %v421
  %1055 = vmatpush1.msra.mxu0 %v420
  %1056 = vmatprep.subr.mxu0 %v417
  %1057 = vmatpush1.msra.mxu0 %v416
  %1058 = vmatprep.subr.mxu0 %v413
  %1059 = vmatpush1.msra.mxu0 %v412
  %1060 = vmatprep.subr.mxu0 %v409
  %1061 = vmatpush1.msra.mxu0 %v408
  %1062 = vmatprep.subr.mxu0 %v405
  %1063 = vmatpush1.msra.mxu0 %v404
  %1064 = vmatprep.subr.mxu0 %v401
  %1065 = vmatpush1.msra.mxu0 %v400
  %1066 = vmatprep.subr.mxu0 %v397
  %1067 = vmatpush1.msra.mxu0 %v396
  %1068 = vmatprep.subr.mxu0 %v393
  %1069 = vmatpush1.msra.mxu0 %v392
  %1070 = vmatprep.subr.mxu0 0.0
  %1071 = vmatpush2.msra.mxu0 0.0
  %1072 = vmatprep.subr.mxu0 0.0
  %1073 = vmatpush2.msra.mxu0 0.0
  %1074 = vmatprep.subr.mxu0 0.0
  %1075 = vmatpush2.msra.mxu0 0.0
  %1076 = vmatprep.subr.mxu0 0.0
  %1077 = vmatpush2.msra.mxu0 0.0
  %1078 = vmatprep.subr.mxu0 0.0
  %1079 = vmatpush2.msra.mxu0 0.0
  %1080 = vmatprep.subr.mxu0 0.0
  %1081 = vmatpush2.msra.mxu0 0.0
  %1082 = vmatprep.subr.mxu0 0.0
  %1083 = vmatpush2.msra.mxu0 0.0
  %1084 = vmatprep.subr.mxu0 0.0
  %1085 = vmatpush2.msra.mxu0 0.0
  %1086 = vmatprep.subr.mxu0 0.0
  %1087 = vmatpush2.msra.mxu0 0.0
  %1088 = vmatprep.subr.mxu0 0.0
  %1089 = vmatpush2.msra.mxu0 0.0
  %1090 = vmatprep.subr.mxu0 0.0
  %1091 = vmatpush2.msra.mxu0 0.0
  %1092 = vmatprep.subr.mxu0 0.0
  %1093 = vmatpush2.msra.mxu0 0.0
  %1094 = vmatprep.subr.mxu0 0.0
  %1095 = vmatpush2.msra.mxu0 0.0
  %1096 = vmatprep.subr.mxu0 0.0
  %1097 = vmatpush2.msra.mxu0 0.0
  %1098 = vmatprep.subr.mxu0 0.0
  %1099 = vmatpush2.msra.mxu0 0.0
  %1100 = vmatprep.subr.mxu0 0.0
  %1101 = vmatpush2.msra.mxu0 0.0
  %1102 = vmatprep.mubr.f32.mxu0 0.0
  %1103 = vmatmul.mubr.f32.gmra.mxu0 %v959
  %v1104 = vpop.f32.mrf.mxu0
  %v1105 = vadd.f32 0.0, %v1104
  %v1106 = vpop.f32.mrf.mxu0
  %v1107 = vadd.f32 0.0, %v1106
  %1108 = vdwg.mxu0
  %v1109 = vadd.f32 %v963, %v1034
  %v1110 = vadd.f32 %v964, %v1036
  %v1111 = vadd.f32 %v965, %v1105
  %v1112 = vadd.f32 %v966, %v1107
  %v1113 = vmul.f32 %v1109, 0.5
  %v1114 = vtanh.pop %v1113
  %v1115 = vmul.f32 %v1114, 0.5
  %v1116 = vadd.f32 %v1115, 0.5
  %v1117 = vmul.f32 %v1110, 0.5
  %v1118 = vtanh.pop %v1117
  %v1119 = vmul.f32 %v1118, 0.5
  %v1120 = vadd.f32 %v1119, 0.5
  %v1121 = vtanh.pop %v1111
  %v1122 = vmul.f32 %v1112, 0.5
  %v1123 = vtanh.pop %v1122
  %v1124 = vmul.f32 %v1123, 0.5
  %v1125 = vadd.f32 %v1124, 0.5
  %v1126 = vmul.f32 %v1120, %v957
  %v1127 = vmul.f32 %v1116, %v1121
  %v1128 = vadd.f32 %v1126, %v1127
  %v1129 = vtanh.pop %v1128
  %v1130 = vmul.f32 %v1125, %v1129
  %s1131 = smul.u32 4, 4
  %s1132 = smul.addr %s1131, 8
  %s1133 = scalar_lea.vmem [#allocation2], %s1132
  %v1134 = vld [vmem:[%s1133] sm:$0xff]
  %v1135 = vld [vmem:[%s1133 + $0x8] sm:$0xff]
  %v1136 = vld [vmem:[%s1133 + $0x10] sm:$0xff]
  %v1137 = vld [vmem:[%s1133 + $0x18] sm:$0xff]
  %1138 = vmatprep.subr.mxu0 %v451
  %1139 = vmatpush1.msra.mxu0 %v450
  %1140 = vmatprep.subr.mxu0 %v447
  %1141 = vmatpush1.msra.mxu0 %v446
  %1142 = vmatprep.subr.mxu0 %v443
  %1143 = vmatpush1.msra.mxu0 %v442
  %1144 = vmatprep.subr.mxu0 %v439
  %1145 = vmatpush1.msra.mxu0 %v438
  %1146 = vmatprep.subr.mxu0 %v435
  %1147 = vmatpush1.msra.mxu0 %v434
  %1148 = vmatprep.subr.mxu0 %v431
  %1149 = vmatpush1.msra.mxu0 %v430
  %1150 = vmatprep.subr.mxu0 %v427
  %1151 = vmatpush1.msra.mxu0 %v426
  %1152 = vmatprep.subr.mxu0 %v423
  %1153 = vmatpush1.msra.mxu0 %v422
  %1154 = vmatprep.subr.mxu0 %v419
  %1155 = vmatpush1.msra.mxu0 %v418
  %1156 = vmatprep.subr.mxu0 %v415
  %1157 = vmatpush1.msra.mxu0 %v414
  %1158 = vmatprep.subr.mxu0 %v411
  %1159 = vmatpush1.msra.mxu0 %v410
  %1160 = vmatprep.subr.mxu0 %v407
  %1161 = vmatpush1.msra.mxu0 %v406
  %1162 = vmatprep.subr.mxu0 %v403
  %1163 = vmatpush1.msra.mxu0 %v402
  %1164 = vmatprep.subr.mxu0 %v399
  %1165 = vmatpush1.msra.mxu0 %v398
  %1166 = vmatprep.subr.mxu0 %v395
  %1167 = vmatpush1.msra.mxu0 %v394
  %1168 = vmatprep.subr.mxu0 %v391
  %1169 = vmatpush1.msra.mxu0 %v390
  %1170 = vmatprep.subr.mxu0 0.0
  %1171 = vmatpush2.msra.mxu0 0.0
  %1172 = vmatprep.subr.mxu0 0.0
  %1173 = vmatpush2.msra.mxu0 0.0
  %1174 = vmatprep.subr.mxu0 0.0
  %1175 = vmatpush2.msra.mxu0 0.0
  %1176 = vmatprep.subr.mxu0 0.0
  %1177 = vmatpush2.msra.mxu0 0.0
  %1178 = vmatprep.subr.mxu0 0.0
  %1179 = vmatpush2.msra.mxu0 0.0
  %1180 = vmatprep.subr.mxu0 0.0
  %1181 = vmatpush2.msra.mxu0 0.0
  %1182 = vmatprep.subr.mxu0 0.0
  %1183 = vmatpush2.msra.mxu0 0.0
  %1184 = vmatprep.subr.mxu0 0.0
  %1185 = vmatpush2.msra.mxu0 0.0
  %1186 = vmatprep.subr.mxu0 0.0
  %1187 = vmatpush2.msra.mxu0 0.0
  %1188 = vmatprep.subr.mxu0 0.0
  %1189 = vmatpush2.msra.mxu0 0.0
  %1190 = vmatprep.subr.mxu0 0.0
  %1191 = vmatpush2.msra.mxu0 0.0
  %1192 = vmatprep.subr.mxu0 0.0
  %1193 = vmatpush2.msra.mxu0 0.0
  %1194 = vmatprep.subr.mxu0 0.0
  %1195 = vmatpush2.msra.mxu0 0.0
  %1196 = vmatprep.subr.mxu0 0.0
  %1197 = vmatpush2.msra.mxu0 0.0
  %1198 = vmatprep.subr.mxu0 0.0
  %1199 = vmatpush2.msra.mxu0 0.0
  %1200 = vmatprep.subr.mxu0 0.0
  %1201 = vmatpush2.msra.mxu0 0.0
  %1202 = vmatprep.mubr.f32.mxu0 0.0
  %1203 = vmatmul.mubr.f32.gmra.mxu0 %v1130
  %v1204 = vpop.f32.mrf.mxu0
  %v1205 = vadd.f32 0.0, %v1204
  %v1206 = vpop.f32.mrf.mxu0
  %v1207 = vadd.f32 0.0, %v1206
  %1208 = vdwg.mxu0
  %1209 = vmatprep.subr.mxu0 %v453
  %1210 = vmatpush1.msra.mxu0 %v452
  %1211 = vmatprep.subr.mxu0 %v449
  %1212 = vmatpush1.msra.mxu0 %v448
  %1213 = vmatprep.subr.mxu0 %v445
  %1214 = vmatpush1.msra.mxu0 %v444
  %1215 = vmatprep.subr.mxu0 %v441
  %1216 = vmatpush1.msra.mxu0 %v440
  %1217 = vmatprep.subr.mxu0 %v437
  %1218 = vmatpush1.msra.mxu0 %v436
  %1219 = vmatprep.subr.mxu0 %v433
  %1220 = vmatpush1.msra.mxu0 %v432
  %1221 = vmatprep.subr.mxu0 %v429
  %1222 = vmatpush1.msra.mxu0 %v428
  %1223 = vmatprep.subr.mxu0 %v425
  %1224 = vmatpush1.msra.mxu0 %v424
  %1225 = vmatprep.subr.mxu0 %v421
  %1226 = vmatpush1.msra.mxu0 %v420
  %1227 = vmatprep.subr.mxu0 %v417
  %1228 = vmatpush1.msra.mxu0 %v416
  %1229 = vmatprep.subr.mxu0 %v413
  %1230 = vmatpush1.msra.mxu0 %v412
  %1231 = vmatprep.subr.mxu0 %v409
  %1232 = vmatpush1.msra.mxu0 %v408
  %1233 = vmatprep.subr.mxu0 %v405
  %1234 = vmatpush1.msra.mxu0 %v404
  %1235 = vmatprep.subr.mxu0 %v401
  %1236 = vmatpush1.msra.mxu0 %v400
  %1237 = vmatprep.subr.mxu0 %v397
  %1238 = vmatpush1.msra.mxu0 %v396
  %1239 = vmatprep.subr.mxu0 %v393
  %1240 = vmatpush1.msra.mxu0 %v392
  %1241 = vmatprep.subr.mxu0 0.0
  %1242 = vmatpush2.msra.mxu0 0.0
  %1243 = vmatprep.subr.mxu0 0.0
  %1244 = vmatpush2.msra.mxu0 0.0
  %1245 = vmatprep.subr.mxu0 0.0
  %1246 = vmatpush2.msra.mxu0 0.0
  %1247 = vmatprep.subr.mxu0 0.0
  %1248 = vmatpush2.msra.mxu0 0.0
  %1249 = vmatprep.subr.mxu0 0.0
  %1250 = vmatpush2.msra.mxu0 0.0
  %1251 = vmatprep.subr.mxu0 0.0
  %1252 = vmatpush2.msra.mxu0 0.0
  %1253 = vmatprep.subr.mxu0 0.0
  %1254 = vmatpush2.msra.mxu0 0.0
  %1255 = vmatprep.subr.mxu0 0.0
  %1256 = vmatpush2.msra.mxu0 0.0
  %1257 = vmatprep.subr.mxu0 0.0
  %1258 = vmatpush2.msra.mxu0 0.0
  %1259 = vmatprep.subr.mxu0 0.0
  %1260 = vmatpush2.msra.mxu0 0.0
  %1261 = vmatprep.subr.mxu0 0.0
  %1262 = vmatpush2.msra.mxu0 0.0
  %1263 = vmatprep.subr.mxu0 0.0
  %1264 = vmatpush2.msra.mxu0 0.0
  %1265 = vmatprep.subr.mxu0 0.0
  %1266 = vmatpush2.msra.mxu0 0.0
  %1267 = vmatprep.subr.mxu0 0.0
  %1268 = vmatpush2.msra.mxu0 0.0
  %1269 = vmatprep.subr.mxu0 0.0
  %1270 = vmatpush2.msra.mxu0 0.0
  %1271 = vmatprep.subr.mxu0 0.0
  %1272 = vmatpush2.msra.mxu0 0.0
  %1273 = vmatprep.mubr.f32.mxu0 0.0
  %1274 = vmatmul.mubr.f32.gmra.mxu0 %v1130
  %v1275 = vpop.f32.mrf.mxu0
  %v1276 = vadd.f32 0.0, %v1275
  %v1277 = vpop.f32.mrf.mxu0
  %v1278 = vadd.f32 0.0, %v1277
  %1279 = vdwg.mxu0
  %v1280 = vadd.f32 %v1134, %v1205
  %v1281 = vadd.f32 %v1135, %v1207
  %v1282 = vadd.f32 %v1136, %v1276
  %v1283 = vadd.f32 %v1137, %v1278
  %v1284 = vmul.f32 %v1280, 0.5
  %v1285 = vtanh.pop %v1284
  %v1286 = vmul.f32 %v1285, 0.5
  %v1287 = vadd.f32 %v1286, 0.5
  %v1288 = vmul.f32 %v1281, 0.5
  %v1289 = vtanh.pop %v1288
  %v1290 = vmul.f32 %v1289, 0.5
  %v1291 = vadd.f32 %v1290, 0.5
  %v1292 = vtanh.pop %v1282
  %v1293 = vmul.f32 %v1283, 0.5
  %v1294 = vtanh.pop %v1293
  %v1295 = vmul.f32 %v1294, 0.5
  %v1296 = vadd.f32 %v1295, 0.5
  %v1297 = vmul.f32 %v1291, %v1128
  %v1298 = vmul.f32 %v1287, %v1292
  %v1299 = vadd.f32 %v1297, %v1298
  %v1300 = vtanh.pop %v1299
  %v1301 = vmul.f32 %v1296, %v1300
  %s1302 = smul.u32 5, 4
  %s1303 = smul.addr %s1302, 8
  %s1304 = scalar_lea.vmem [#allocation2], %s1303
  %v1305 = vld [vmem:[%s1304] sm:$0xff]
  %v1306 = vld [vmem:[%s1304 + $0x8] sm:$0xff]
  %v1307 = vld [vmem:[%s1304 + $0x10] sm:$0xff]
  %v1308 = vld [vmem:[%s1304 + $0x18] sm:$0xff]
  %1309 = vmatprep.subr.mxu0 %v451
  %1310 = vmatpush1.msra.mxu0 %v450
  %1311 = vmatprep.subr.mxu0 %v447
  %1312 = vmatpush1.msra.mxu0 %v446
  %1313 = vmatprep.subr.mxu0 %v443
  %1314 = vmatpush1.msra.mxu0 %v442
  %1315 = vmatprep.subr.mxu0 %v439
  %1316 = vmatpush1.msra.mxu0 %v438
  %1317 = vmatprep.subr.mxu0 %v435
  %1318 = vmatpush1.msra.mxu0 %v434
  %1319 = vmatprep.subr.mxu0 %v431
  %1320 = vmatpush1.msra.mxu0 %v430
  %1321 = vmatprep.subr.mxu0 %v427
  %1322 = vmatpush1.msra.mxu0 %v426
  %1323 = vmatprep.subr.mxu0 %v423
  %1324 = vmatpush1.msra.mxu0 %v422
  %1325 = vmatprep.subr.mxu0 %v419
  %1326 = vmatpush1.msra.mxu0 %v418
  %1327 = vmatprep.subr.mxu0 %v415
  %1328 = vmatpush1.msra.mxu0 %v414
  %1329 = vmatprep.subr.mxu0 %v411
  %1330 = vmatpush1.msra.mxu0 %v410
  %1331 = vmatprep.subr.mxu0 %v407
  %1332 = vmatpush1.msra.mxu0 %v406
  %1333 = vmatprep.subr.mxu0 %v403
  %1334 = vmatpush1.msra.mxu0 %v402
  %1335 = vmatprep.subr.mxu0 %v399
  %1336 = vmatpush1.msra.mxu0 %v398
  %1337 = vmatprep.subr.mxu0 %v395
  %1338 = vmatpush1.msra.mxu0 %v394
  %1339 = vmatprep.subr.mxu0 %v391
  %1340 = vmatpush1.msra.mxu0 %v390
  %1341 = vmatprep.subr.mxu0 0.0
  %1342 = vmatpush2.msra.mxu0 0.0
  %1343 = vmatprep.subr.mxu0 0.0
  %1344 = vmatpush2.msra.mxu0 0.0
  %1345 = vmatprep.subr.mxu0 0.0
  %1346 = vmatpush2.msra.mxu0 0.0
  %1347 = vmatprep.subr.mxu0 0.0
  %1348 = vmatpush2.msra.mxu0 0.0
  %1349 = vmatprep.subr.mxu0 0.0
  %1350 = vmatpush2.msra.mxu0 0.0
  %1351 = vmatprep.subr.mxu0 0.0
  %1352 = vmatpush2.msra.mxu0 0.0
  %1353 = vmatprep.subr.mxu0 0.0
  %1354 = vmatpush2.msra.mxu0 0.0
  %1355 = vmatprep.subr.mxu0 0.0
  %1356 = vmatpush2.msra.mxu0 0.0
  %1357 = vmatprep.subr.mxu0 0.0
  %1358 = vmatpush2.msra.mxu0 0.0
  %1359 = vmatprep.subr.mxu0 0.0
  %1360 = vmatpush2.msra.mxu0 0.0
  %1361 = vmatprep.subr.mxu0 0.0
  %1362 = vmatpush2.msra.mxu0 0.0
  %1363 = vmatprep.subr.mxu0 0.0
  %1364 = vmatpush2.msra.mxu0 0.0
  %1365 = vmatprep.subr.mxu0 0.0
  %1366 = vmatpush2.msra.mxu0 0.0
  %1367 = vmatprep.subr.mxu0 0.0
  %1368 = vmatpush2.msra.mxu0 0.0
  %1369 = vmatprep.subr.mxu0 0.0
  %1370 = vmatpush2.msra.mxu0 0.0
  %1371 = vmatprep.subr.mxu0 0.0
  %1372 = vmatpush2.msra.mxu0 0.0
  %1373 = vmatprep.mubr.f32.mxu0 0.0
  %1374 = vmatmul.mubr.f32.gmra.mxu0 %v1301
  %v1375 = vpop.f32.mrf.mxu0
  %v1376 = vadd.f32 0.0, %v1375
  %v1377 = vpop.f32.mrf.mxu0
  %v1378 = vadd.f32 0.0, %v1377
  %1379 = vdwg.mxu0
  %1380 = vmatprep.subr.mxu0 %v453
  %1381 = vmatpush1.msra.mxu0 %v452
  %1382 = vmatprep.subr.mxu0 %v449
  %1383 = vmatpush1.msra.mxu0 %v448
  %1384 = vmatprep.subr.mxu0 %v445
  %1385 = vmatpush1.msra.mxu0 %v444
  %1386 = vmatprep.subr.mxu0 %v441
  %1387 = vmatpush1.msra.mxu0 %v440
  %1388 = vmatprep.subr.mxu0 %v437
  %1389 = vmatpush1.msra.mxu0 %v436
  %1390 = vmatprep.subr.mxu0 %v433
  %1391 = vmatpush1.msra.mxu0 %v432
  %1392 = vmatprep.subr.mxu0 %v429
  %1393 = vmatpush1.msra.mxu0 %v428
  %1394 = vmatprep.subr.mxu0 %v425
  %1395 = vmatpush1.msra.mxu0 %v424
  %1396 = vmatprep.subr.mxu0 %v421
  %1397 = vmatpush1.msra.mxu0 %v420
  %1398 = vmatprep.subr.mxu0 %v417
  %1399 = vmatpush1.msra.mxu0 %v416
  %1400 = vmatprep.subr.mxu0 %v413
  %1401 = vmatpush1.msra.mxu0 %v412
  %1402 = vmatprep.subr.mxu0 %v409
  %1403 = vmatpush1.msra.mxu0 %v408
  %1404 = vmatprep.subr.mxu0 %v405
  %1405 = vmatpush1.msra.mxu0 %v404
  %1406 = vmatprep.subr.mxu0 %v401
  %1407 = vmatpush1.msra.mxu0 %v400
  %1408 = vmatprep.subr.mxu0 %v397
  %1409 = vmatpush1.msra.mxu0 %v396
  %1410 = vmatprep.subr.mxu0 %v393
  %1411 = vmatpush1.msra.mxu0 %v392
  %1412 = vmatprep.subr.mxu0 0.0
  %1413 = vmatpush2.msra.mxu0 0.0
  %1414 = vmatprep.subr.mxu0 0.0
  %1415 = vmatpush2.msra.mxu0 0.0
  %1416 = vmatprep.subr.mxu0 0.0
  %1417 = vmatpush2.msra.mxu0 0.0
  %1418 = vmatprep.subr.mxu0 0.0
  %1419 = vmatpush2.msra.mxu0 0.0
  %1420 = vmatprep.subr.mxu0 0.0
  %1421 = vmatpush2.msra.mxu0 0.0
  %1422 = vmatprep.subr.mxu0 0.0
  %1423 = vmatpush2.msra.mxu0 0.0
  %1424 = vmatprep.subr.mxu0 0.0
  %1425 = vmatpush2.msra.mxu0 0.0
  %1426 = vmatprep.subr.mxu0 0.0
  %1427 = vmatpush2.msra.mxu0 0.0
  %1428 = vmatprep.subr.mxu0 0.0
  %1429 = vmatpush2.msra.mxu0 0.0
  %1430 = vmatprep.subr.mxu0 0.0
  %1431 = vmatpush2.msra.mxu0 0.0
  %1432 = vmatprep.subr.mxu0 0.0
  %1433 = vmatpush2.msra.mxu0 0.0
  %1434 = vmatprep.subr.mxu0 0.0
  %1435 = vmatpush2.msra.mxu0 0.0
  %1436 = vmatprep.subr.mxu0 0.0
  %1437 = vmatpush2.msra.mxu0 0.0
  %1438 = vmatprep.subr.mxu0 0.0
  %1439 = vmatpush2.msra.mxu0 0.0
  %1440 = vmatprep.subr.mxu0 0.0
  %1441 = vmatpush2.msra.mxu0 0.0
  %1442 = vmatprep.subr.mxu0 0.0
  %1443 = vmatpush2.msra.mxu0 0.0
  %1444 = vmatprep.mubr.f32.mxu0 0.0
  %1445 = vmatmul.mubr.f32.gmra.mxu0 %v1301
  %v1446 = vpop.f32.mrf.mxu0
  %v1447 = vadd.f32 0.0, %v1446
  %v1448 = vpop.f32.mrf.mxu0
  %v1449 = vadd.f32 0.0, %v1448
  %1450 = vdwg.mxu0
  %v1451 = vadd.f32 %v1305, %v1376
  %v1452 = vadd.f32 %v1306, %v1378
  %v1453 = vadd.f32 %v1307, %v1447
  %v1454 = vadd.f32 %v1308, %v1449
  %v1455 = vmul.f32 %v1451, 0.5
  %v1456 = vtanh.pop %v1455
  %v1457 = vmul.f32 %v1456, 0.5
  %v1458 = vadd.f32 %v1457, 0.5
  %v1459 = vmul.f32 %v1452, 0.5
  %v1460 = vtanh.pop %v1459
  %v1461 = vmul.f32 %v1460, 0.5
  %v1462 = vadd.f32 %v1461, 0.5
  %v1463 = vtanh.pop %v1453
  %v1464 = vmul.f32 %v1454, 0.5
  %v1465 = vtanh.pop %v1464
  %v1466 = vmul.f32 %v1465, 0.5
  %v1467 = vadd.f32 %v1466, 0.5
  %v1468 = vmul.f32 %v1462, %v1299
  %v1469 = vmul.f32 %v1458, %v1463
  %v1470 = vadd.f32 %v1468, %v1469
  %v1471 = vtanh.pop %v1470
  %v1472 = vmul.f32 %v1467, %v1471
  %s1473 = smul.u32 6, 4
  %s1474 = smul.addr %s1473, 8
  %s1475 = scalar_lea.vmem [#allocation2], %s1474
  %v1476 = vld [vmem:[%s1475] sm:$0xff]
  %v1477 = vld [vmem:[%s1475 + $0x8] sm:$0xff]
  %v1478 = vld [vmem:[%s1475 + $0x10] sm:$0xff]
  %v1479 = vld [vmem:[%s1475 + $0x18] sm:$0xff]
  %1480 = vmatprep.subr.mxu0 %v451
  %1481 = vmatpush1.msra.mxu0 %v450
  %1482 = vmatprep.subr.mxu0 %v447
  %1483 = vmatpush1.msra.mxu0 %v446
  %1484 = vmatprep.subr.mxu0 %v443
  %1485 = vmatpush1.msra.mxu0 %v442
  %1486 = vmatprep.subr.mxu0 %v439
  %1487 = vmatpush1.msra.mxu0 %v438
  %1488 = vmatprep.subr.mxu0 %v435
  %1489 = vmatpush1.msra.mxu0 %v434
  %1490 = vmatprep.subr.mxu0 %v431
  %1491 = vmatpush1.msra.mxu0 %v430
  %1492 = vmatprep.subr.mxu0 %v427
  %1493 = vmatpush1.msra.mxu0 %v426
  %1494 = vmatprep.subr.mxu0 %v423
  %1495 = vmatpush1.msra.mxu0 %v422
  %1496 = vmatprep.subr.mxu0 %v419
  %1497 = vmatpush1.msra.mxu0 %v418
  %1498 = vmatprep.subr.mxu0 %v415
  %1499 = vmatpush1.msra.mxu0 %v414
  %1500 = vmatprep.subr.mxu0 %v411
  %1501 = vmatpush1.msra.mxu0 %v410
  %1502 = vmatprep.subr.mxu0 %v407
  %1503 = vmatpush1.msra.mxu0 %v406
  %1504 = vmatprep.subr.mxu0 %v403
  %1505 = vmatpush1.msra.mxu0 %v402
  %1506 = vmatprep.subr.mxu0 %v399
  %1507 = vmatpush1.msra.mxu0 %v398
  %1508 = vmatprep.subr.mxu0 %v395
  %1509 = vmatpush1.msra.mxu0 %v394
  %1510 = vmatprep.subr.mxu0 %v391
  %1511 = vmatpush1.msra.mxu0 %v390
  %1512 = vmatprep.subr.mxu0 0.0
  %1513 = vmatpush2.msra.mxu0 0.0
  %1514 = vmatprep.subr.mxu0 0.0
  %1515 = vmatpush2.msra.mxu0 0.0
  %1516 = vmatprep.subr.mxu0 0.0
  %1517 = vmatpush2.msra.mxu0 0.0
  %1518 = vmatprep.subr.mxu0 0.0
  %1519 = vmatpush2.msra.mxu0 0.0
  %1520 = vmatprep.subr.mxu0 0.0
  %1521 = vmatpush2.msra.mxu0 0.0
  %1522 = vmatprep.subr.mxu0 0.0
  %1523 = vmatpush2.msra.mxu0 0.0
  %1524 = vmatprep.subr.mxu0 0.0
  %1525 = vmatpush2.msra.mxu0 0.0
  %1526 = vmatprep.subr.mxu0 0.0
  %1527 = vmatpush2.msra.mxu0 0.0
  %1528 = vmatprep.subr.mxu0 0.0
  %1529 = vmatpush2.msra.mxu0 0.0
  %1530 = vmatprep.subr.mxu0 0.0
  %1531 = vmatpush2.msra.mxu0 0.0
  %1532 = vmatprep.subr.mxu0 0.0
  %1533 = vmatpush2.msra.mxu0 0.0
  %1534 = vmatprep.subr.mxu0 0.0
  %1535 = vmatpush2.msra.mxu0 0.0
  %1536 = vmatprep.subr.mxu0 0.0
  %1537 = vmatpush2.msra.mxu0 0.0
  %1538 = vmatprep.subr.mxu0 0.0
  %1539 = vmatpush2.msra.mxu0 0.0
  %1540 = vmatprep.subr.mxu0 0.0
  %1541 = vmatpush2.msra.mxu0 0.0
  %1542 = vmatprep.subr.mxu0 0.0
  %1543 = vmatpush2.msra.mxu0 0.0
  %1544 = vmatprep.mubr.f32.mxu0 0.0
  %1545 = vmatmul.mubr.f32.gmra.mxu0 %v1472
  %v1546 = vpop.f32.mrf.mxu0
  %v1547 = vadd.f32 0.0, %v1546
  %v1548 = vpop.f32.mrf.mxu0
  %v1549 = vadd.f32 0.0, %v1548
  %1550 = vdwg.mxu0
  %1551 = vmatprep.subr.mxu0 %v453
  %1552 = vmatpush1.msra.mxu0 %v452
  %1553 = vmatprep.subr.mxu0 %v449
  %1554 = vmatpush1.msra.mxu0 %v448
  %1555 = vmatprep.subr.mxu0 %v445
  %1556 = vmatpush1.msra.mxu0 %v444
  %1557 = vmatprep.subr.mxu0 %v441
  %1558 = vmatpush1.msra.mxu0 %v440
  %1559 = vmatprep.subr.mxu0 %v437
  %1560 = vmatpush1.msra.mxu0 %v436
  %1561 = vmatprep.subr.mxu0 %v433
  %1562 = vmatpush1.msra.mxu0 %v432
  %1563 = vmatprep.subr.mxu0 %v429
  %1564 = vmatpush1.msra.mxu0 %v428
  %1565 = vmatprep.subr.mxu0 %v425
  %1566 = vmatpush1.msra.mxu0 %v424
  %1567 = vmatprep.subr.mxu0 %v421
  %1568 = vmatpush1.msra.mxu0 %v420
  %1569 = vmatprep.subr.mxu0 %v417
  %1570 = vmatpush1.msra.mxu0 %v416
  %1571 = vmatprep.subr.mxu0 %v413
  %1572 = vmatpush1.msra.mxu0 %v412
  %1573 = vmatprep.subr.mxu0 %v409
  %1574 = vmatpush1.msra.mxu0 %v408
  %1575 = vmatprep.subr.mxu0 %v405
  %1576 = vmatpush1.msra.mxu0 %v404
  %1577 = vmatprep.subr.mxu0 %v401
  %1578 = vmatpush1.msra.mxu0 %v400
  %1579 = vmatprep.subr.mxu0 %v397
  %1580 = vmatpush1.msra.mxu0 %v396
  %1581 = vmatprep.subr.mxu0 %v393
  %1582 = vmatpush1.msra.mxu0 %v392
  %1583 = vmatprep.subr.mxu0 0.0
  %1584 = vmatpush2.msra.mxu0 0.0
  %1585 = vmatprep.subr.mxu0 0.0
  %1586 = vmatpush2.msra.mxu0 0.0
  %1587 = vmatprep.subr.mxu0 0.0
  %1588 = vmatpush2.msra.mxu0 0.0
  %1589 = vmatprep.subr.mxu0 0.0
  %1590 = vmatpush2.msra.mxu0 0.0
  %1591 = vmatprep.subr.mxu0 0.0
  %1592 = vmatpush2.msra.mxu0 0.0
  %1593 = vmatprep.subr.mxu0 0.0
  %1594 = vmatpush2.msra.mxu0 0.0
  %1595 = vmatprep.subr.mxu0 0.0
  %1596 = vmatpush2.msra.mxu0 0.0
  %1597 = vmatprep.subr.mxu0 0.0
  %1598 = vmatpush2.msra.mxu0 0.0
  %1599 = vmatprep.subr.mxu0 0.0
  %1600 = vmatpush2.msra.mxu0 0.0
  %1601 = vmatprep.subr.mxu0 0.0
  %1602 = vmatpush2.msra.mxu0 0.0
  %1603 = vmatprep.subr.mxu0 0.0
  %1604 = vmatpush2.msra.mxu0 0.0
  %1605 = vmatprep.subr.mxu0 0.0
  %1606 = vmatpush2.msra.mxu0 0.0
  %1607 = vmatprep.subr.mxu0 0.0
  %1608 = vmatpush2.msra.mxu0 0.0
  %1609 = vmatprep.subr.mxu0 0.0
  %1610 = vmatpush2.msra.mxu0 0.0
  %1611 = vmatprep.subr.mxu0 0.0
  %1612 = vmatpush2.msra.mxu0 0.0
  %1613 = vmatprep.subr.mxu0 0.0
  %1614 = vmatpush2.msra.mxu0 0.0
  %1615 = vmatprep.mubr.f32.mxu0 0.0
  %1616 = vmatmul.mubr.f32.gmra.mxu0 %v1472
  %v1617 = vpop.f32.mrf.mxu0
  %v1618 = vadd.f32 0.0, %v1617
  %v1619 = vpop.f32.mrf.mxu0
  %v1620 = vadd.f32 0.0, %v1619
  %1621 = vdwg.mxu0
  %v1622 = vadd.f32 %v1476, %v1547
  %v1623 = vadd.f32 %v1477, %v1549
  %v1624 = vadd.f32 %v1478, %v1618
  %v1625 = vadd.f32 %v1479, %v1620
  %v1626 = vmul.f32 %v1622, 0.5
  %v1627 = vtanh.pop %v1626
  %v1628 = vmul.f32 %v1627, 0.5
  %v1629 = vadd.f32 %v1628, 0.5
  %v1630 = vmul.f32 %v1623, 0.5
  %v1631 = vtanh.pop %v1630
  %v1632 = vmul.f32 %v1631, 0.5
  %v1633 = vadd.f32 %v1632, 0.5
  %v1634 = vtanh.pop %v1624
  %v1635 = vmul.f32 %v1625, 0.5
  %v1636 = vtanh.pop %v1635
  %v1637 = vmul.f32 %v1636, 0.5
  %v1638 = vadd.f32 %v1637, 0.5
  %v1639 = vmul.f32 %v1633, %v1470
  %v1640 = vmul.f32 %v1629, %v1634
  %v1641 = vadd.f32 %v1639, %v1640
  %v1642 = vtanh.pop %v1641
  %v1643 = vmul.f32 %v1638, %v1642
  %s1644 = smul.u32 7, 4
  %s1645 = smul.addr %s1644, 8
  %s1646 = scalar_lea.vmem [#allocation2], %s1645
  %v1647 = vld [vmem:[%s1646] sm:$0xff]
  %v1648 = vld [vmem:[%s1646 + $0x8] sm:$0xff]
  %v1649 = vld [vmem:[%s1646 + $0x10] sm:$0xff]
  %v1650 = vld [vmem:[%s1646 + $0x18] sm:$0xff]
  %1651 = vmatprep.subr.mxu0 %v451
  %1652 = vmatpush1.msra.mxu0 %v450
  %1653 = vmatprep.subr.mxu0 %v447
  %1654 = vmatpush1.msra.mxu0 %v446
  %1655 = vmatprep.subr.mxu0 %v443
  %1656 = vmatpush1.msra.mxu0 %v442
  %1657 = vmatprep.subr.mxu0 %v439
  %1658 = vmatpush1.msra.mxu0 %v438
  %1659 = vmatprep.subr.mxu0 %v435
  %1660 = vmatpush1.msra.mxu0 %v434
  %1661 = vmatprep.subr.mxu0 %v431
  %1662 = vmatpush1.msra.mxu0 %v430
  %1663 = vmatprep.subr.mxu0 %v427
  %1664 = vmatpush1.msra.mxu0 %v426
  %1665 = vmatprep.subr.mxu0 %v423
  %1666 = vmatpush1.msra.mxu0 %v422
  %1667 = vmatprep.subr.mxu0 %v419
  %1668 = vmatpush1.msra.mxu0 %v418
  %1669 = vmatprep.subr.mxu0 %v415
  %1670 = vmatpush1.msra.mxu0 %v414
  %1671 = vmatprep.subr.mxu0 %v411
  %1672 = vmatpush1.msra.mxu0 %v410
  %1673 = vmatprep.subr.mxu0 %v407
  %1674 = vmatpush1.msra.mxu0 %v406
  %1675 = vmatprep.subr.mxu0 %v403
  %1676 = vmatpush1.msra.mxu0 %v402
  %1677 = vmatprep.subr.mxu0 %v399
  %1678 = vmatpush1.msra.mxu0 %v398
  %1679 = vmatprep.subr.mxu0 %v395
  %1680 = vmatpush1.msra.mxu0 %v394
  %1681 = vmatprep.subr.mxu0 %v391
  %1682 = vmatpush1.msra.mxu0 %v390
  %1683 = vmatprep.subr.mxu0 0.0
  %1684 = vmatpush2.msra.mxu0 0.0
  %1685 = vmatprep.subr.mxu0 0.0
  %1686 = vmatpush2.msra.mxu0 0.0
  %1687 = vmatprep.subr.mxu0 0.0
  %1688 = vmatpush2.msra.mxu0 0.0
  %1689 = vmatprep.subr.mxu0 0.0
  %1690 = vmatpush2.msra.mxu0 0.0
  %1691 = vmatprep.subr.mxu0 0.0
  %1692 = vmatpush2.msra.mxu0 0.0
  %1693 = vmatprep.subr.mxu0 0.0
  %1694 = vmatpush2.msra.mxu0 0.0
  %1695 = vmatprep.subr.mxu0 0.0
  %1696 = vmatpush2.msra.mxu0 0.0
  %1697 = vmatprep.subr.mxu0 0.0
  %1698 = vmatpush2.msra.mxu0 0.0
  %1699 = vmatprep.subr.mxu0 0.0
  %1700 = vmatpush2.msra.mxu0 0.0
  %1701 = vmatprep.subr.mxu0 0.0
  %1702 = vmatpush2.msra.mxu0 0.0
  %1703 = vmatprep.subr.mxu0 0.0
  %1704 = vmatpush2.msra.mxu0 0.0
  %1705 = vmatprep.subr.mxu0 0.0
  %1706 = vmatpush2.msra.mxu0 0.0
  %1707 = vmatprep.subr.mxu0 0.0
  %1708 = vmatpush2.msra.mxu0 0.0
  %1709 = vmatprep.subr.mxu0 0.0
  %1710 = vmatpush2.msra.mxu0 0.0
  %1711 = vmatprep.subr.mxu0 0.0
  %1712 = vmatpush2.msra.mxu0 0.0
  %1713 = vmatprep.subr.mxu0 0.0
  %1714 = vmatpush2.msra.mxu0 0.0
  %1715 = vmatprep.mubr.f32.mxu0 0.0
  %1716 = vmatmul.mubr.f32.gmra.mxu0 %v1643
  %v1717 = vpop.f32.mrf.mxu0
  %v1718 = vadd.f32 0.0, %v1717
  %v1719 = vpop.f32.mrf.mxu0
  %v1720 = vadd.f32 0.0, %v1719
  %1721 = vdwg.mxu0
  %1722 = vmatprep.subr.mxu0 %v453
  %1723 = vmatpush1.msra.mxu0 %v452
  %1724 = vmatprep.subr.mxu0 %v449
  %1725 = vmatpush1.msra.mxu0 %v448
  %1726 = vmatprep.subr.mxu0 %v445
  %1727 = vmatpush1.msra.mxu0 %v444
  %1728 = vmatprep.subr.mxu0 %v441
  %1729 = vmatpush1.msra.mxu0 %v440
  %1730 = vmatprep.subr.mxu0 %v437
  %1731 = vmatpush1.msra.mxu0 %v436
  %1732 = vmatprep.subr.mxu0 %v433
  %1733 = vmatpush1.msra.mxu0 %v432
  %1734 = vmatprep.subr.mxu0 %v429
  %1735 = vmatpush1.msra.mxu0 %v428
  %1736 = vmatprep.subr.mxu0 %v425
  %1737 = vmatpush1.msra.mxu0 %v424
  %1738 = vmatprep.subr.mxu0 %v421
  %1739 = vmatpush1.msra.mxu0 %v420
  %1740 = vmatprep.subr.mxu0 %v417
  %1741 = vmatpush1.msra.mxu0 %v416
  %1742 = vmatprep.subr.mxu0 %v413
  %1743 = vmatpush1.msra.mxu0 %v412
  %1744 = vmatprep.subr.mxu0 %v409
  %1745 = vmatpush1.msra.mxu0 %v408
  %1746 = vmatprep.subr.mxu0 %v405
  %1747 = vmatpush1.msra.mxu0 %v404
  %1748 = vmatprep.subr.mxu0 %v401
  %1749 = vmatpush1.msra.mxu0 %v400
  %1750 = vmatprep.subr.mxu0 %v397
  %1751 = vmatpush1.msra.mxu0 %v396
  %1752 = vmatprep.subr.mxu0 %v393
  %1753 = vmatpush1.msra.mxu0 %v392
  %1754 = vmatprep.subr.mxu0 0.0
  %1755 = vmatpush2.msra.mxu0 0.0
  %1756 = vmatprep.subr.mxu0 0.0
  %1757 = vmatpush2.msra.mxu0 0.0
  %1758 = vmatprep.subr.mxu0 0.0
  %1759 = vmatpush2.msra.mxu0 0.0
  %1760 = vmatprep.subr.mxu0 0.0
  %1761 = vmatpush2.msra.mxu0 0.0
  %1762 = vmatprep.subr.mxu0 0.0
  %1763 = vmatpush2.msra.mxu0 0.0
  %1764 = vmatprep.subr.mxu0 0.0
  %1765 = vmatpush2.msra.mxu0 0.0
  %1766 = vmatprep.subr.mxu0 0.0
  %1767 = vmatpush2.msra.mxu0 0.0
  %1768 = vmatprep.subr.mxu0 0.0
  %1769 = vmatpush2.msra.mxu0 0.0
  %1770 = vmatprep.subr.mxu0 0.0
  %1771 = vmatpush2.msra.mxu0 0.0
  %1772 = vmatprep.subr.mxu0 0.0
  %1773 = vmatpush2.msra.mxu0 0.0
  %1774 = vmatprep.subr.mxu0 0.0
  %1775 = vmatpush2.msra.mxu0 0.0
  %1776 = vmatprep.subr.mxu0 0.0
  %1777 = vmatpush2.msra.mxu0 0.0
  %1778 = vmatprep.subr.mxu0 0.0
  %1779 = vmatpush2.msra.mxu0 0.0
  %1780 = vmatprep.subr.mxu0 0.0
  %1781 = vmatpush2.msra.mxu0 0.0
  %1782 = vmatprep.subr.mxu0 0.0
  %1783 = vmatpush2.msra.mxu0 0.0
  %1784 = vmatprep.subr.mxu0 0.0
  %1785 = vmatpush2.msra.mxu0 0.0
  %1786 = vmatprep.mubr.f32.mxu0 0.0
  %1787 = vmatmul.mubr.f32.gmra.mxu0 %v1643
  %v1788 = vpop.f32.mrf.mxu0
  %v1789 = vadd.f32 0.0, %v1788
  %v1790 = vpop.f32.mrf.mxu0
  %v1791 = vadd.f32 0.0, %v1790
  %1792 = vdwg.mxu0
  %v1793 = vadd.f32 %v1647, %v1718
  %v1794 = vadd.f32 %v1648, %v1720
  %v1795 = vadd.f32 %v1649, %v1789
  %v1796 = vadd.f32 %v1650, %v1791
  %v1797 = vmul.f32 %v1793, 0.5
  %v1798 = vtanh.pop %v1797
  %v1799 = vmul.f32 %v1798, 0.5
  %v1800 = vadd.f32 %v1799, 0.5
  %v1801 = vmul.f32 %v1794, 0.5
  %v1802 = vtanh.pop %v1801
  %v1803 = vmul.f32 %v1802, 0.5
  %v1804 = vadd.f32 %v1803, 0.5
  %v1805 = vtanh.pop %v1795
  %v1806 = vmul.f32 %v1796, 0.5
  %v1807 = vtanh.pop %v1806
  %v1808 = vmul.f32 %v1807, 0.5
  %v1809 = vadd.f32 %v1808, 0.5
  %v1810 = vmul.f32 %v1804, %v1641
  %v1811 = vmul.f32 %v1800, %v1805
  %v1812 = vadd.f32 %v1810, %v1811
  %v1813 = vtanh.pop %v1812
  %v1814 = vmul.f32 %v1809, %v1813
  %1815 = vst [vmem:[#allocation3] sm:$0xff] %v1814
  %1816 = vst [vmem:[#allocation4] sm:$0xff] %v1812
  // Predicated region
  $region30: #{_deepar_forward_impl.1} parent=0 // pred_check
    %p1817 = pneg %p23
  $region31: #{_deepar_forward_impl.1} parent=0 // pred_check_branch
    %1819 = sbr.rel (%p1817) target = $region33
  $region32: #{_deepar_forward_impl.1} parent=0 // pred_region
    %v1820 = vld [vmem:[%s4] sm:$0xff]
    %v1821 = vld [vmem:[%s4 + $0x8] sm:$0xff]
    %v1822 = vld [vmem:[%s4 + $0x10] sm:$0xff]
    %v1823 = vld [vmem:[%s4 + $0x18] sm:$0xff]
    %v1824 = vld [vmem:[%s4 + $0x20] sm:$0xff]
    %v1825 = vld [vmem:[%s4 + $0x28] sm:$0xff]
    %v1826 = vld [vmem:[%s4 + $0x30] sm:$0xff]
    %v1827 = vld [vmem:[%s4 + $0x38] sm:$0xff]
    %v1828 = vld [vmem:[%s4 + $0x40] sm:$0xff]
    %v1829 = vld [vmem:[%s4 + $0x48] sm:$0xff]
    %v1830 = vld [vmem:[%s4 + $0x50] sm:$0xff]
    %v1831 = vld [vmem:[%s4 + $0x58] sm:$0xff]
    %v1832 = vld [vmem:[%s4 + $0x60] sm:$0xff]
    %v1833 = vld [vmem:[%s4 + $0x68] sm:$0xff]
    %v1834 = vld [vmem:[%s4 + $0x70] sm:$0xff]
    %v1835 = vld [vmem:[%s4 + $0x78] sm:$0xff]
    %v1836 = vld [vmem:[%s5] sm:$0x1]
    %v1838 = vlaneseq
    %v1839 = vshrl.u32 %v1838, 7
    %v1840 = vsub.s32 0, %v1839
    %v1841 = vrot.slane %v1836, %v1840
    %1843 = vmatprep.subr.mxu0 0.0
    %1844 = vmatpush1.msra.mxu0 %v1835
    %1845 = vmatprep.subr.mxu0 0.0
    %1846 = vmatpush1.msra.mxu0 %v1834
    %1847 = vmatprep.subr.mxu0 0.0
    %1848 = vmatpush1.msra.mxu0 %v1833
    %1849 = vmatprep.subr.mxu0 0.0
    %1850 = vmatpush1.msra.mxu0 %v1832
    %1851 = vmatprep.subr.mxu0 0.0
    %1852 = vmatpush1.msra.mxu0 %v1831
    %1853 = vmatprep.subr.mxu0 0.0
    %1854 = vmatpush1.msra.mxu0 %v1830
    %1855 = vmatprep.subr.mxu0 0.0
    %1856 = vmatpush1.msra.mxu0 %v1829
    %1857 = vmatprep.subr.mxu0 0.0
    %1858 = vmatpush1.msra.mxu0 %v1828
    %1859 = vmatprep.subr.mxu0 0.0
    %1860 = vmatpush1.msra.mxu0 %v1827
    %1861 = vmatprep.subr.mxu0 0.0
    %1862 = vmatpush1.msra.mxu0 %v1826
    %1863 = vmatprep.subr.mxu0 0.0
    %1864 = vmatpush1.msra.mxu0 %v1825
    %1865 = vmatprep.subr.mxu0 0.0
    %1866 = vmatpush1.msra.mxu0 %v1824
    %1867 = vmatprep.subr.mxu0 0.0
    %1868 = vmatpush1.msra.mxu0 %v1823
    %1869 = vmatprep.subr.mxu0 0.0
    %1870 = vmatpush1.msra.mxu0 %v1822
    %1871 = vmatprep.subr.mxu0 0.0
    %1872 = vmatpush1.msra.mxu0 %v1821
    %1873 = vmatprep.subr.mxu0 0.0
    %1874 = vmatpush1.msra.mxu0 %v1820
    %1875 = vmatprep.subr.mxu0 0.0
    %1876 = vmatpush2.msra.mxu0 0.0
    %1877 = vmatprep.subr.mxu0 0.0
    %1878 = vmatpush2.msra.mxu0 0.0
    %1879 = vmatprep.subr.mxu0 0.0
    %1880 = vmatpush2.msra.mxu0 0.0
    %1881 = vmatprep.subr.mxu0 0.0
    %1882 = vmatpush2.msra.mxu0 0.0
    %1883 = vmatprep.subr.mxu0 0.0
    %1884 = vmatpush2.msra.mxu0 0.0
    %1885 = vmatprep.subr.mxu0 0.0
    %1886 = vmatpush2.msra.mxu0 0.0
    %1887 = vmatprep.subr.mxu0 0.0
    %1888 = vmatpush2.msra.mxu0 0.0
    %1889 = vmatprep.subr.mxu0 0.0
    %1890 = vmatpush2.msra.mxu0 0.0
    %1891 = vmatprep.subr.mxu0 0.0
    %1892 = vmatpush2.msra.mxu0 0.0
    %1893 = vmatprep.subr.mxu0 0.0
    %1894 = vmatpush2.msra.mxu0 0.0
    %1895 = vmatprep.subr.mxu0 0.0
    %1896 = vmatpush2.msra.mxu0 0.0
    %1897 = vmatprep.subr.mxu0 0.0
    %1898 = vmatpush2.msra.mxu0 0.0
    %1899 = vmatprep.subr.mxu0 0.0
    %1900 = vmatpush2.msra.mxu0 0.0
    %1901 = vmatprep.subr.mxu0 0.0
    %1902 = vmatpush2.msra.mxu0 0.0
    %1903 = vmatprep.subr.mxu0 0.0
    %1904 = vmatpush2.msra.mxu0 0.0
    %1905 = vmatprep.subr.mxu0 0.0
    %1906 = vmatpush2.msra.mxu0 0.0
    %1907 = vmatprep.mubr.f32.mxu0 0.0
    %1908 = vmatmul.mubr.f32.gmra.mxu0 %v1814
    %v1909 = vpop.f32.mrf.mxu0
    %v1910 = vadd.f32 %v1841, %v1909
    %v1911 = vpop.f32.mrf.mxu0
    %1912 = vdwg.mxu0
    %1913 = vst [vmem:[%s6] sm:$0xff] %v1910
  $region33: #{_deepar_forward_impl.1} parent=0 // pred_fallthru
    _
  // Predicated region
  $region34: #{_deepar_forward_impl.1} parent=0 // pred_check
    _
  $region35: #{_deepar_forward_impl.1} parent=0 // pred_check_branch
    %1915 = sbr.rel (0) target = $region37
  $region36: #{_deepar_forward_impl.1} parent=0 // pred_region
    _
  $region37: #{_deepar_forward_impl.1} parent=0 // pred_fallthru
    _
  // Predicated region
  $region38: #{_deepar_forward_impl.1} parent=0 // pred_check
    _
  $region39: #{_deepar_forward_impl.1} parent=0 // pred_check_branch
    %1917 = sbr.rel (0) target = $region41
  $region40: #{_deepar_forward_impl.1} parent=0 // pred_region
    _
  $region41: #{_deepar_forward_impl.1} parent=0 // pred_fallthru
    _

</llo_original>
